<compile_context>
chip_gen: v6e
topology: v6e:2x2x1
jax: 0.10.0
libtpu: 0.0.40
codegen_flags: <defaults>
</compile_context>

<pallas_src>
import functools
import math

import jax
import jax.numpy as jnp
from jax.experimental import pallas as pl
from jax.experimental.pallas import tpu as pltpu


def _cross_attn_kernel(x_ref, wq_ref, bq_ref, ct_ref, wkvT_ref, bkv_ref, o_ref,
                       q_scr, kt_scr, vt_scr,
                       *, d, m_total, tile_m, chunk_n, masked, compute_dtype):
    f32 = jnp.float32
    cdt = compute_dtype
    tn = x_ref.shape[0]
    m_pad = ct_ref.shape[1]
    num_m = m_pad // tile_m
    num_rc = tn // chunk_n
    n_interior = num_m - 1          # last context chunk is peeled (only it can be padded)

    # ---- Projections (MXU; tiny vs. the attention work).  Recomputed per grid step so
    # ---- the kernel stays correct under megacore "parallel" sharding of query tiles.
    kvt = jnp.dot(wkvT_ref[...], ct_ref[...],
                  preferred_element_type=f32) + bkv_ref[...]          # (2D, m_pad)
    kt_scr[...] = kvt[:d, :].astype(cdt)                              # K^T, lane-dense
    vt_scr[...] = kvt[d:, :].astype(cdt)                              # V^T, lane-dense
    # Q projection once per query tile; 1/sqrt(df) is folded into wq/bq by the wrapper.
    q_scr[...] = jnp.dot(x_ref[...].astype(f32), wq_ref[...],
                         preferred_element_type=f32) + bq_ref[...]

    if masked:
        # Multiplicative 0/1 keep-mask for the peeled tail chunk only (bf16-safe).
        col = jax.lax.broadcasted_iota(jnp.int32, (1, 1, tile_m), 2)
        tail_keep = (col < (m_total - n_interior * tile_m)).astype(cdt)
    else:
        tail_keep = None

    def ctx_step(q_b, carry, c0, keep):
        m_run, l_run, acc_run = carry                                 # (chunk_n, D) f32
        kt_c = kt_scr[:, pl.ds(c0, tile_m)]                           # (D, tile_m) cdt
        vt_c = vt_scr[:, pl.ds(c0, tile_m)]
        s = q_b * kt_c[None, :, :]                                    # (chunk_n, D, tile_m)
        m_new = jnp.maximum(m_run, jnp.max(s, axis=-1).astype(f32))
        alpha = jnp.exp(m_run - m_new)                                # (chunk_n, D) f32
        p = jnp.exp(s - m_new[:, :, None].astype(cdt))
        if keep is not None:
            p = p * keep
        l_run = alpha * l_run + jnp.sum(p, axis=-1).astype(f32)
        acc_run = alpha * acc_run + jnp.sum(p * vt_c[None, :, :], axis=-1).astype(f32)
        return m_new, l_run, acc_run

    @pl.loop(0, num_rc)
    def _row(r):
        r0 = pl.multiple_of(r * chunk_n, chunk_n)
        q_c = q_scr[pl.ds(r0, chunk_n), :]                            # (chunk_n, D) f32
        # Hoist the lane-splat of q out of the context loop (reused by every chunk).
        q_b = jnp.broadcast_to(q_c.astype(cdt)[:, :, None], (chunk_n, d, tile_m))

        init = (jnp.full((chunk_n, d), -jnp.inf, f32),                # running max
                jnp.zeros((chunk_n, d), f32),                         # running denom
                jnp.zeros((chunk_n, d), f32))                         # running numer

        def body(j, carry):
            return ctx_step(q_b, carry, pl.multiple_of(j * tile_m, tile_m), None)

        carry = jax.lax.fori_loop(0, n_interior, body, init,
                                  unroll=(n_interior <= 8))
        # Peeled last chunk: the only one that may contain padded context columns.
        _, l_run, acc_run = ctx_step(q_b, carry, n_interior * tile_m, tail_keep)

        out_c = acc_run * pl.reciprocal(l_run, approx=False)          # (chunk_n, D) f32
        x_c = x_ref[pl.ds(r0, chunk_n), :].astype(f32)                # residual
        o_ref[pl.ds(r0, chunk_n), :] = (out_c + x_c).astype(o_ref.dtype)


def _round_up(a, b):
    return ((a + b - 1) // b) * b


def cross_attention(x, c, wq, wk, wv, bq, bk, bv, n_head, *,
                    tile_n=128, tile_m=128, chunk_n=8,
                    compute_dtype=jnp.float32):
    """x: (B, S, D) or (N, D); c likewise.  Weights are (in, out): y = x @ W + b.

    compute_dtype=jnp.bfloat16 enables the bf16 score/exp path (recommended on
    v6e / v7x only); accumulators and the final normalization always stay f32.
    """
    shape = x.shape
    x2 = x.reshape(-1, x.shape[-1]) if x.ndim == 3 else x
    c2 = c.reshape(-1, c.shape[-1]) if c.ndim == 3 else c

    N, D = x2.shape
    M = c2.shape[0]
    df = D // n_head
    scale = 1.0 / math.sqrt(df)
    f32 = jnp.float32

    # ---- query tiling: keep >= 2 tiles when possible so both v7x TensorCores get work.
    if N > tile_n:
        tn = tile_n
        n_pad = _round_up(N, tn)
    elif N >= 16:
        tn = _round_up((N + 1) // 2, 8)
        n_pad = 2 * tn
    else:
        tn = N
        n_pad = N
    grid_n = n_pad // tn
    cn = chunk_n if tn % chunk_n == 0 else tn         # row chunk must divide the tile

    # ---- context chunking: register block width only; K^T/V^T are fully VMEM-resident.
    tm = tile_m if M > tile_m else M
    m_pad = _round_up(M, tm)
    masked = m_pad > M
    assert m_pad - M < tm, "at most one partially padded context chunk"

    x_p = jnp.pad(x2, ((0, n_pad - N), (0, 0))) if n_pad > N else x2
    c_p = jnp.pad(c2, ((0, m_pad - M), (0, 0))) if m_pad > M else c2

    # Fold the 1/sqrt(df) score scale into the Q projection.
    wq_s = (wq * scale).astype(f32)
    bq_s = (bq * scale).astype(f32).reshape(1, D)
    # Fused, transposed K/V weight: one MXU dot emits the lane-dense (2D, m_pad) K^T/V^T.
    wkv_t = jnp.concatenate([wk, wv], axis=1).astype(f32).T            # (2D, D)
    bkv_c = jnp.concatenate([bk, bv]).astype(f32).reshape(2 * D, 1)    # (2D, 1)
    ct = c_p.astype(f32).T                                             # (D, m_pad)

    kernel = functools.partial(
        _cross_attn_kernel, d=D, m_total=M, tile_m=tm, chunk_n=cn,
        masked=masked, compute_dtype=compute_dtype)

    # VMEM residency is tiny (D = 32); size the scoped limit from actual need and keep
    # headroom under v7x's 64 MiB/TC instead of the previous blanket 48 MiB request.
    esz = 2 if compute_dtype == jnp.bfloat16 else 4
    resident = (2 * 4 * (2 * tn * D + D * m_pad + 2 * D * D + 3 * D)   # dbl-buffered I/O
                + 4 * tn * D + 2 * esz * D * m_pad                     # scratch
                + 4 * 4 * cn * D * tm)                                 # loop temps/spill
    vmem_limit = int(min(64 * 2 ** 20, max(16 * 2 ** 20, 2 * resident)))

    cost = pl.CostEstimate(
        flops=int(6 * n_pad * m_pad * D + 2 * n_pad * D * D
                  + grid_n * 2 * (2 * D) * D * m_pad),
        transcendentals=int(n_pad * m_pad * D),
        bytes_accessed=int(4 * (2 * n_pad * D + D * m_pad + 3 * D * D)),
    )

    out = pl.pallas_call(
        kernel,
        out_shape=jax.ShapeDtypeStruct((n_pad, D), x2.dtype),
        grid=(grid_n,),
        in_specs=[pl.BlockSpec((tn, D), lambda i: (i, 0)),        # x tile (proj + resid)
                  pl.BlockSpec((D, D), lambda i: (0, 0)),         # Wq (scale folded in)
                  pl.BlockSpec((1, D), lambda i: (0, 0)),         # bq (scale folded in)
                  pl.BlockSpec((D, m_pad), lambda i: (0, 0)),     # c^T (fully resident)
                  pl.BlockSpec((2 * D, D), lambda i: (0, 0)),     # fused K/V weight^T
                  pl.BlockSpec((2 * D, 1), lambda i: (0, 0))],    # fused K/V bias
        out_specs=pl.BlockSpec((tn, D), lambda i: (i, 0)),
        scratch_shapes=[pltpu.VMEM((tn, D), f32),                 # Q tile
                        pltpu.VMEM((D, m_pad), compute_dtype),    # K^T (resident)
                        pltpu.VMEM((D, m_pad), compute_dtype)],   # V^T (resident)
        compiler_params=pltpu.CompilerParams(
            dimension_semantics=("parallel",),
            vmem_limit_bytes=vmem_limit),
        cost_estimate=cost,
    )(x_p, wq_s, bq_s, ct, wkv_t, bkv_c)

    out = out[:N] if n_pad > N else out
    return out.reshape(shape) if len(shape) == 3 else out


def reference_cross_attention(x, c, wq, wk, wv, bq, bk, bv, n_head):
    """Pure-JAX reference mirroring the PyTorch forward."""
    shape = x.shape
    if x.ndim == 3:
        x = x.reshape(-1, x.shape[-1])
        c = c.reshape(-1, c.shape[-1])
    D = x.shape[-1]
    df = D // n_head
    Q = x @ wq + bq
    K = c @ wk + bk
    V = c @ wv + bv
    Q = Q.reshape(Q.shape[0], n_head, df)[:, None]      # (N,1,H,df)
    K = K.reshape(K.shape[0], n_head, df)[None]         # (1,M,H,df)
    V = V.reshape(V.shape[0], n_head, df)[None]         # (1,M,H,df)
    Y = Q * K / math.sqrt(df)
    attn = jax.nn.softmax(Y, axis=1)
    wV = (attn * V).sum(axis=1).reshape(x.shape[0], D)
    out = wV + x
    if len(shape) == 3:
        out = out.reshape(shape)
    return out


if __name__ == "__main__":
    # config: n_indim = 32, num_head_cross = 4 -> df = 8
    D, n_head = 32, 4
    key = jax.random.PRNGKey(0)
    kx, kc, kq, kk, kv_, kbq, kbk, kbv = jax.random.split(key, 8)

    init = 1.0 / math.sqrt(D)
    wq = jax.random.uniform(kq, (D, D), jnp.float32, -init, init)
    wk = jax.random.uniform(kk, (D, D), jnp.float32, -init, init)
    wv = jax.random.uniform(kv_, (D, D), jnp.float32, -init, init)
    bq = jax.random.uniform(kbq, (D,), jnp.float32, -init, init)
    bk = jax.random.uniform(kbk, (D,), jnp.float32, -init, init)
    bv = jax.random.uniform(kbv, (D,), jnp.float32, -init, init)

    # Case 1: small (B, S, D) input (B=2, S=8 -> N = M = 16; two query tiles of 8 rows).
    B, S = 2, 8
    x = jax.random.normal(kx, (B, S, D), dtype=jnp.float32)
    c = jax.random.normal(kc, (B, S, D), dtype=jnp.float32)
    out = jax.block_until_ready(
        cross_attention(x, c, wq, wk, wv, bq, bk, bv, n_head))
    ref = reference_cross_attention(x, c, wq, wk, wv, bq, bk, bv, n_head)
    assert out.shape == (B, S, D)
    err1 = float(jnp.max(jnp.abs(out - ref)))
    assert jnp.allclose(out, ref, atol=5e-4, rtol=5e-4), f"case1 mismatch |err|={err1}"

    # Case 2: larger 2-D input exercising query-tile grid, padding and tail masking
    # (N = M = 400 -> n_pad = m_pad = 512; 112 padded context columns live only in the
    #  statically peeled last context chunk).
    N2 = 400
    x_big = jax.random.normal(kx, (N2, D), dtype=jnp.float32)
    c_big = jax.random.normal(kc, (N2, D), dtype=jnp.float32)
    out2 = jax.block_until_ready(
        cross_attention(x_big, c_big, wq, wk, wv, bq, bk, bv, n_head))
    ref2 = reference_cross_attention(x_big, c_big, wq, wk, wv, bq, bk, bv, n_head)
    assert out2.shape == (N2, D)
    err2 = float(jnp.max(jnp.abs(out2 - ref2)))
    assert jnp.allclose(out2, ref2, atol=5e-4, rtol=5e-4), f"case2 mismatch |err|={err2}"

    # Case 3 (opt-in): bf16 score/exp path recommended for v6e/v7x.  Skipped gracefully
    # if this TPU generation's Mosaic lowering rejects bf16 vector math (e.g. v5e).
    out3 = None
    try:
        out3 = jax.block_until_ready(
            cross_attention(x_big, c_big, wq, wk, wv, bq, bk, bv, n_head,
                            compute_dtype=jnp.bfloat16))
    except Exception:
        pass
    if out3 is not None:
        assert out3.shape == (N2, D)
        err3 = float(jnp.max(jnp.abs(out3 - ref2)))
        assert err3 < 0.1, f"bf16 case mismatch |err|={err3}"

    print("KERNEL_OK")
</pallas_src>

<mosaic_0001>
module attributes {stable_mosaic.version = 11 : i64} {
  func.func @_cross_attn_kernel(%arg0: i32, %arg1: memref<8x32xf32, #tpu.memory_space<vmem>>, %arg2: memref<32x32xf32, #tpu.memory_space<vmem>>, %arg3: memref<1x32xf32, #tpu.memory_space<vmem>>, %arg4: memref<32x16xf32, #tpu.memory_space<vmem>>, %arg5: memref<64x32xf32, #tpu.memory_space<vmem>>, %arg6: memref<64x1xf32, #tpu.memory_space<vmem>>, %arg7: memref<8x32xf32, #tpu.memory_space<vmem>>, %arg8: memref<8x32xf32, #tpu.memory_space<vmem>>, %arg9: memref<32x16xf32, #tpu.memory_space<vmem>>, %arg10: memref<32x16xf32, #tpu.memory_space<vmem>>) attributes {dimension_semantics = [#tpu.dimension_semantics<parallel>], iteration_bounds = array<i64: 2>, scalar_prefetch = 0 : i64, scratch_operands = 3 : i64, tpu.core_type = #tpu.core_type<tc>, window_params = [{transform_indices = @transform_0, window_bounds = array<i64: 8, 32>}, {pipeline_mode = #tpu.pipeline_mode<synchronous>, transform_indices = @transform_1, window_bounds = array<i64: 32, 32>}, {pipeline_mode = #tpu.pipeline_mode<synchronous>, transform_indices = @transform_2, window_bounds = array<i64: 1, 32>}, {pipeline_mode = #tpu.pipeline_mode<synchronous>, transform_indices = @transform_3, window_bounds = array<i64: 32, 16>}, {pipeline_mode = #tpu.pipeline_mode<synchronous>, transform_indices = @transform_4, window_bounds = array<i64: 64, 32>}, {pipeline_mode = #tpu.pipeline_mode<synchronous>, transform_indices = @transform_5, window_bounds = array<i64: 64, 1>}, {transform_indices = @transform_6, window_bounds = array<i64: 8, 32>}]} {
    %c0 = arith.constant 0 : index
    %c0_0 = arith.constant 0 : index
    %0 = vector.load %arg5[%c0, %c0_0] : memref<64x32xf32, #tpu.memory_space<vmem>>, vector<64x32xf32>
    %c0_1 = arith.constant 0 : index
    %c0_2 = arith.constant 0 : index
    %1 = vector.load %arg4[%c0_1, %c0_2] : memref<32x16xf32, #tpu.memory_space<vmem>>, vector<32x16xf32>
    %cst = arith.constant dense<0.000000e+00> : vector<64x16xf32>
    %2 = tpu.matmul %0, %1, %cst {dimension_numbers = #tpu.dot_dimension_numbers<[1], [0], [0], [1], [0, 0, 1, 1], [], []>} : vector<64x32xf32>, vector<32x16xf32>, vector<64x16xf32> -> vector<64x16xf32>
    %c0_3 = arith.constant 0 : index
    %c0_4 = arith.constant 0 : index
    %3 = vector.load %arg6[%c0_3, %c0_4] : memref<64x1xf32, #tpu.memory_space<vmem>>, vector<64x1xf32>
    %4 = vector.broadcast %3 : vector<64x1xf32> to vector<64x16xf32>
    %5 = arith.addf %2, %4 : vector<64x16xf32>
    %6 = vector.extract_strided_slice %5 {offsets = [0, 0], sizes = [32, 16], strides = [1, 1]} : vector<64x16xf32> to vector<32x16xf32>
    %c0_5 = arith.constant 0 : index
    %c0_6 = arith.constant 0 : index
    %7 = vector.load %arg9[%c0_5, %c0_6] : memref<32x16xf32, #tpu.memory_space<vmem>>, vector<32x16xf32>
    tpu.vector_store %arg9[%c0_5, %c0_6], %6 {strides = array<i32>} : memref<32x16xf32, #tpu.memory_space<vmem>>, vector<32x16xf32>,
    %8 = vector.extract_strided_slice %5 {offsets = [32, 0], sizes = [32, 16], strides = [1, 1]} : vector<64x16xf32> to vector<32x16xf32>
    %c0_7 = arith.constant 0 : index
    %c0_8 = arith.constant 0 : index
    %9 = vector.load %arg10[%c0_7, %c0_8] : memref<32x16xf32, #tpu.memory_space<vmem>>, vector<32x16xf32>
    tpu.vector_store %arg10[%c0_7, %c0_8], %8 {strides = array<i32>} : memref<32x16xf32, #tpu.memory_space<vmem>>, vector<32x16xf32>,
    %c0_9 = arith.constant 0 : index
    %c0_10 = arith.constant 0 : index
    %10 = vector.load %arg1[%c0_9, %c0_10] : memref<8x32xf32, #tpu.memory_space<vmem>>, vector<8x32xf32>
    %c0_11 = arith.constant 0 : index
    %c0_12 = arith.constant 0 : index
    %11 = vector.load %arg2[%c0_11, %c0_12] : memref<32x32xf32, #tpu.memory_space<vmem>>, vector<32x32xf32>
    %cst_13 = arith.constant dense<0.000000e+00> : vector<8x32xf32>
    %12 = tpu.matmul %10, %11, %cst_13 {dimension_numbers = #tpu.dot_dimension_numbers<[1], [0], [0], [1], [0, 0, 1, 1], [], []>} : vector<8x32xf32>, vector<32x32xf32>, vector<8x32xf32> -> vector<8x32xf32>
    %c0_14 = arith.constant 0 : index
    %c0_15 = arith.constant 0 : index
    %13 = vector.load %arg3[%c0_14, %c0_15] : memref<1x32xf32, #tpu.memory_space<vmem>>, vector<1x32xf32>
    %14 = vector.broadcast %13 : vector<1x32xf32> to vector<8x32xf32>
    %15 = arith.addf %12, %14 : vector<8x32xf32>
    %c0_16 = arith.constant 0 : index
    %c0_17 = arith.constant 0 : index
    %16 = vector.load %arg8[%c0_16, %c0_17] : memref<8x32xf32, #tpu.memory_space<vmem>>, vector<8x32xf32>
    tpu.vector_store %arg8[%c0_16, %c0_17], %15 {strides = array<i32>} : memref<8x32xf32, #tpu.memory_space<vmem>>, vector<8x32xf32>,
    %c0_i32 = arith.constant 0 : i32
    %c1_i32 = arith.constant 1 : i32
    %17 = arith.muli %c0_i32, %c1_i32 : i32
    %c0_i32_18 = arith.constant 0 : i32
    %18 = arith.addi %c0_i32_18, %17 : i32
    %c8_i32 = arith.constant 8 : i32
    %19 = arith.muli %18, %c8_i32 : i32
    %20 = tpu.assume_multiple %19, 8 : i32
    %21 = arith.index_cast %20 : i32 to index
    %c0_19 = arith.constant 0 : index
    %22 = vector.load %arg8[%21, %c0_19] : memref<8x32xf32, #tpu.memory_space<vmem>>, vector<8x32xf32>
    %23 = vector.shape_cast %22 : vector<8x32xf32> to vector<8x32x1xf32>
    %24 = vector.shape_cast %23 : vector<8x32x1xf32> to vector<8x32x1xf32>
    %25 = vector.broadcast %24 : vector<8x32x1xf32> to vector<8x32x16xf32>
    %cst_20 = arith.constant 0xFF800000 : f32
    %26 = vector.broadcast %cst_20 : f32 to vector<8x32xf32>
    %cst_21 = arith.constant 0.000000e+00 : f32
    %27 = vector.broadcast %cst_21 : f32 to vector<8x32xf32>
    %cst_22 = arith.constant 0.000000e+00 : f32
    %28 = vector.broadcast %cst_22 : f32 to vector<8x32xf32>
    %c0_i32_23 = arith.constant 0 : i32
    %c0_i32_24 = arith.constant 0 : i32
    %29 = arith.addi %c0_i32_23, %c0_i32_24 : i32
    %c1_i32_25 = arith.constant 1 : i32
    %30:3 = scf.for %arg11 = %c0_i32_23 to %29 step %c1_i32_25 iter_args(%arg12 = %26, %arg13 = %27, %arg14 = %28) -> (vector<8x32xf32>, vector<8x32xf32>, vector<8x32xf32>)  : i32 {
      %c16_i32 = arith.constant 16 : i32
      %60 = arith.muli %arg11, %c16_i32 : i32
      %61 = tpu.assume_multiple %60, 16 : i32
      %c0_37 = arith.constant 0 : index
      %62 = arith.index_cast %61 : i32 to index
      %63 = vector.load %arg9[%c0_37, %62] : memref<32x16xf32, #tpu.memory_space<vmem>>, vector<32x16xf32>
      %c0_38 = arith.constant 0 : index
      %64 = arith.index_cast %61 : i32 to index
      %65 = vector.load %arg10[%c0_38, %64] : memref<32x16xf32, #tpu.memory_space<vmem>>, vector<32x16xf32>
      %66 = vector.shape_cast %63 : vector<32x16xf32> to vector<1x32x16xf32>
      %67 = vector.broadcast %66 : vector<1x32x16xf32> to vector<8x32x16xf32>
      %68 = arith.mulf %25, %67 : vector<8x32x16xf32>
      %cst_39 = arith.constant dense<0xFF800000> : vector<8x32xf32>
      %69 = vector.multi_reduction <maximumf>, %68, %cst_39 [2] : vector<8x32x16xf32> to vector<8x32xf32>
      %70 = arith.maximumf %arg12, %69 : vector<8x32xf32>
      %71 = arith.subf %arg12, %70 : vector<8x32xf32>
      %72 = math.exp %71 : vector<8x32xf32>
      %73 = vector.shape_cast %70 : vector<8x32xf32> to vector<8x32x1xf32>
      %74 = vector.broadcast %73 : vector<8x32x1xf32> to vector<8x32x16xf32>
      %75 = arith.subf %68, %74 : vector<8x32x16xf32>
      %76 = math.exp %75 : vector<8x32x16xf32>
      %77 = arith.mulf %72, %arg13 : vector<8x32xf32>
      %cst_40 = arith.constant dense<0.000000e+00> : vector<8x32xf32>
      %78 = vector.multi_reduction <add>, %76, %cst_40 [2] : vector<8x32x16xf32> to vector<8x32xf32>
      %79 = arith.addf %77, %78 : vector<8x32xf32>
      %80 = arith.mulf %72, %arg14 : vector<8x32xf32>
      %81 = vector.shape_cast %65 : vector<32x16xf32> to vector<1x32x16xf32>
      %82 = vector.broadcast %81 : vector<1x32x16xf32> to vector<8x32x16xf32>
      %83 = arith.mulf %76, %82 : vector<8x32x16xf32>
      %cst_41 = arith.constant dense<0.000000e+00> : vector<8x32xf32>
      %84 = vector.multi_reduction <add>, %83, %cst_41 [2] : vector<8x32x16xf32> to vector<8x32xf32>
      %85 = arith.addf %80, %84 : vector<8x32xf32>
      scf.yield %70, %79, %85 : vector<8x32xf32>, vector<8x32xf32>, vector<8x32xf32>
    }
    %c0_i32_26 = arith.constant 0 : i32
    %c0_27 = arith.constant 0 : index
    %c0_28 = arith.constant 0 : index
    %31 = vector.load %arg9[%c0_27, %c0_28] : memref<32x16xf32, #tpu.memory_space<vmem>>, vector<32x16xf32>
    %c0_29 = arith.constant 0 : index
    %c0_30 = arith.constant 0 : index
    %32 = vector.load %arg10[%c0_29, %c0_30] : memref<32x16xf32, #tpu.memory_space<vmem>>, vector<32x16xf32>
    %33 = vector.shape_cast %31 : vector<32x16xf32> to vector<1x32x16xf32>
    %34 = vector.broadcast %33 : vector<1x32x16xf32> to vector<8x32x16xf32>
    %35 = arith.mulf %25, %34 : vector<8x32x16xf32>
    %cst_31 = arith.constant dense<0xFF800000> : vector<8x32xf32>
    %36 = vector.multi_reduction <maximumf>, %35, %cst_31 [2] : vector<8x32x16xf32> to vector<8x32xf32>
    %37 = arith.maximumf %30#0, %36 : vector<8x32xf32>
    %38 = arith.subf %30#0, %37 : vector<8x32xf32>
    %39 = math.exp %38 : vector<8x32xf32>
    %40 = vector.shape_cast %37 : vector<8x32xf32> to vector<8x32x1xf32>
    %41 = vector.broadcast %40 : vector<8x32x1xf32> to vector<8x32x16xf32>
    %42 = arith.subf %35, %41 : vector<8x32x16xf32>
    %43 = math.exp %42 : vector<8x32x16xf32>
    %44 = arith.mulf %39, %30#1 : vector<8x32xf32>
    %cst_32 = arith.constant dense<0.000000e+00> : vector<8x32xf32>
    %45 = vector.multi_reduction <add>, %43, %cst_32 [2] : vector<8x32x16xf32> to vector<8x32xf32>
    %46 = arith.addf %44, %45 : vector<8x32xf32>
    %47 = arith.mulf %39, %30#2 : vector<8x32xf32>
    %48 = vector.shape_cast %32 : vector<32x16xf32> to vector<1x32x16xf32>
    %49 = vector.broadcast %48 : vector<1x32x16xf32> to vector<8x32x16xf32>
    %50 = arith.mulf %43, %49 : vector<8x32x16xf32>
    %cst_33 = arith.constant dense<0.000000e+00> : vector<8x32xf32>
    %51 = vector.multi_reduction <add>, %50, %cst_33 [2] : vector<8x32x16xf32> to vector<8x32xf32>
    %52 = arith.addf %47, %51 : vector<8x32xf32>
    %53 = tpu.reciprocal %46 : vector<8x32xf32> -> vector<8x32xf32>
    %54 = arith.mulf %52, %53 : vector<8x32xf32>
    %55 = arith.index_cast %20 : i32 to index
    %c0_34 = arith.constant 0 : index
    %56 = vector.load %arg1[%55, %c0_34] : memref<8x32xf32, #tpu.memory_space<vmem>>, vector<8x32xf32>
    %57 = arith.addf %54, %56 : vector<8x32xf32>
    %58 = arith.index_cast %20 : i32 to index
    %c0_35 = arith.constant 0 : index
    %59 = vector.load %arg7[%58, %c0_35] : memref<8x32xf32, #tpu.memory_space<vmem>>, vector<8x32xf32>
    tpu.vector_store %arg7[%58, %c0_35], %57 {strides = array<i32>} : memref<8x32xf32, #tpu.memory_space<vmem>>, vector<8x32xf32>,
    %c1_i32_36 = arith.constant 1 : i32
    return
  }
  func.func @transform_0(%arg0: i32) -> (i32, i32) {
    %c0_i32 = arith.constant 0 : i32
    %c0_i32_0 = arith.constant 0 : i32
    return %arg0, %c0_i32 : i32, i32
  }
  func.func @transform_1(%arg0: i32) -> (i32, i32) {
    %c0_i32 = arith.constant 0 : i32
    %c0_i32_0 = arith.constant 0 : i32
    %c0_i32_1 = arith.constant 0 : i32
    return %c0_i32, %c0_i32_0 : i32, i32
  }
  func.func @transform_2(%arg0: i32) -> (i32, i32) {
    %c0_i32 = arith.constant 0 : i32
    %c0_i32_0 = arith.constant 0 : i32
    %c0_i32_1 = arith.constant 0 : i32
    return %c0_i32, %c0_i32_0 : i32, i32
  }
  func.func @transform_3(%arg0: i32) -> (i32, i32) {
    %c0_i32 = arith.constant 0 : i32
    %c0_i32_0 = arith.constant 0 : i32
    %c0_i32_1 = arith.constant 0 : i32
    return %c0_i32, %c0_i32_0 : i32, i32
  }
  func.func @transform_4(%arg0: i32) -> (i32, i32) {
    %c0_i32 = arith.constant 0 : i32
    %c0_i32_0 = arith.constant 0 : i32
    %c0_i32_1 = arith.constant 0 : i32
    return %c0_i32, %c0_i32_0 : i32, i32
  }
  func.func @transform_5(%arg0: i32) -> (i32, i32) {
    %c0_i32 = arith.constant 0 : i32
    %c0_i32_0 = arith.constant 0 : i32
    %c0_i32_1 = arith.constant 0 : i32
    return %c0_i32, %c0_i32_0 : i32, i32
  }
  func.func @transform_6(%arg0: i32) -> (i32, i32) {
    %c0_i32 = arith.constant 0 : i32
    %c0_i32_0 = arith.constant 0 : i32
    return %arg0, %c0_i32 : i32, i32
  }
}

</mosaic_0001>

<llo_original>
// kernel: tpu_custom_call.1
$region0: #{tpu_custom_call.1}
  #allocation0 [shape = 'u32[]', space=smem, size = 0x4, offset = 0x4, fixed_abs, tag = 'smem constant byte address 0x4 - core index']
  #allocation1 [shape = 'u32[144,128]{1,0:T(1,128)}', space=vmem, size = 0x12000, scoped, tag = 'internal scratch']
  #allocation2 [shape = 'f32[8,32]{1,0:T(8,128)}', space=vmem, size = 0x1000, scoped, tag = 'scratch operand']
  #allocation3 [shape = 'f32[32,16]{1,0:T(8,128)}', space=vmem, size = 0x4000, scoped, tag = 'scratch operand']
  #allocation4 [shape = 'f32[32,16]{1,0:T(8,128)}', space=vmem, size = 0x4000, scoped, tag = 'scratch operand']
  %s0 = inlined_call_operand.vmem [shape: f32[16,32], index: 0, kind: input, shape index: {}]
  %s1 = inlined_call_operand.vmem [shape: f32[32,32], index: 1, kind: input, shape index: {}]
  %s2 = inlined_call_operand.vmem [shape: f32[1,32], index: 2, kind: input, shape index: {}]
  %s3 = inlined_call_operand.vmem [shape: f32[32,16], index: 3, kind: input, shape index: {}]
  %s4 = inlined_call_operand.vmem [shape: f32[64,32], index: 4, kind: input, shape index: {}]
  %s5 = inlined_call_operand.vmem [shape: f32[64,1], index: 5, kind: input, shape index: {}]
  %s6 = inlined_call_operand.hbm [shape: f32[16,32], index: 6, kind: output, shape index: {}]
  %s7 = sld [smem:[#allocation0]]
  $region57: #{tpu_custom_call.1} parent=0
    _
  %s9 = ssub.s32 1, %s7
  %s10 = scalar_select 0, %s9, %s7
  $region1: #{tpu_custom_call.1} parent=0
    #allocation5 [shape = 'u8[8192]{0}', space=vmem, size = 0x2000, scoped, tag = 'output window, operand 0']
    #allocation6 [shape = 's32[2]{0}', space=sflag, size = 0x8, scoped, tag = 'scoped memory for tpu_custom_call.1']
    %11 = vsyncpa [#allocation6], 0
    %s12 = scalar_lea.sflag [#allocation6], 1
    %13 = vsyncpa %s12, 0
    loop: start=0, step=1, limit=4
    $region2: #{tpu_custom_call.1} parent=1 // loop_pre_header
      _
    $region3: #{tpu_custom_call.1} parent=1 // loop_header
      %s15 = sphi 0, %s19
      %p16 = scmp.ge.s32.totalorder %s15, 4
      %s25 = sphi 0, %s27
      %s28 = sphi 0, %s25
      %s29 = sphi 0, %s28
      %s45 = sphi 0, %s29
      %s49 = sphi 0, %s49
      %s51 = sphi 0, %s49
      %s52 = sphi 0, %s51
      %s66 = sphi 0, %s52
      %s70 = sphi 0, %s70
      %s72 = sphi 0, %s70
      %s73 = sphi 0, %s72
      %s87 = sphi 0, %s73
      %s91 = sphi 0, %s91
      %s93 = sphi 0, %s91
      %s94 = sphi 0, %s93
      %s108 = sphi 0, %s94
      %s112 = sphi 0, %s112
      %s114 = sphi 0, %s112
      %s115 = sphi 0, %s114
      %s129 = sphi 0, %s115
      %s133 = sphi 0, %s133
      %s135 = sphi 0, %s133
      %s136 = sphi 0, %s135
      %s150 = sphi 0, %s136
      %s156 = sphi 0, %s158
      %s159 = sphi 0, %s156
      %s160 = sphi 0, %s159
      %s176 = sphi 0, %s160
    $region4: #{tpu_custom_call.1} parent=1 // loop_header_branch
      %18 = sbr.rel (%p16) target = $region8
    $region5: #{tpu_custom_call.1} parent=1 // loop_body
      %s20 = ssub.s32 %s15, 1
      %s21 = ssub.s32 %s15, 2
      %s22 = sadd.s32 %s15, 1
      %s23 = ssub.s32 %s15, %s22
      %p24 = scmp.eq.s32.totalorder %s23, 0
      %s26 = sadd.s32 %s25, 1
      %s27 = scalar_select %p24, %s25, %s26
      %p30 = pneg %p24
      %p31 = scmp.eq.s32.totalorder %s15, 1
      %p32 = por %p30, %p31
      %p33 = scmp.ne.s32.totalorder %s25, %s28
      %p34 = scmp.eq.s32.totalorder %s15, 0
      %p35 = por %p33, %p34
      %p36 = scmp.ne.s32.totalorder %s25, %s28
      %p37 = scmp.eq.s32.totalorder %s20, 1
      %p38 = por %p36, %p37
      %p39 = scmp.ne.s32.totalorder %s28, %s29
      %p40 = scmp.eq.s32.totalorder %s20, 0
      %p41 = por %p39, %p40
      %p42 = scmp.ne.s32.totalorder %s28, %s29
      %p43 = scmp.eq.s32.totalorder %s21, 1
      %p44 = por %p42, %p43
      %p46 = scmp.ne.s32.totalorder %s29, %s45
      %p47 = scmp.eq.s32.totalorder %s21, 0
      %p48 = por %p46, %p47
      %s50 = sadd.s32 %s49, 1
      %p53 = scmp.eq.s32.totalorder %s15, 1
      %p54 = scmp.ne.s32.totalorder %s49, %s51
      %p55 = scmp.eq.s32.totalorder %s15, 0
      %p56 = por %p54, %p55
      %p57 = scmp.ne.s32.totalorder %s49, %s51
      %p58 = scmp.eq.s32.totalorder %s20, 1
      %p59 = por %p57, %p58
      %p60 = scmp.ne.s32.totalorder %s51, %s52
      %p61 = scmp.eq.s32.totalorder %s20, 0
      %p62 = por %p60, %p61
      %p63 = scmp.ne.s32.totalorder %s51, %s52
      %p64 = scmp.eq.s32.totalorder %s21, 1
      %p65 = por %p63, %p64
      %p67 = scmp.ne.s32.totalorder %s52, %s66
      %p68 = scmp.eq.s32.totalorder %s21, 0
      %p69 = por %p67, %p68
      %s71 = sadd.s32 %s70, 1
      %p74 = scmp.eq.s32.totalorder %s15, 1
      %p75 = scmp.ne.s32.totalorder %s70, %s72
      %p76 = scmp.eq.s32.totalorder %s15, 0
      %p77 = por %p75, %p76
      %p78 = scmp.ne.s32.totalorder %s70, %s72
      %p79 = scmp.eq.s32.totalorder %s20, 1
      %p80 = por %p78, %p79
      %p81 = scmp.ne.s32.totalorder %s72, %s73
      %p82 = scmp.eq.s32.totalorder %s20, 0
      %p83 = por %p81, %p82
      %p84 = scmp.ne.s32.totalorder %s72, %s73
      %p85 = scmp.eq.s32.totalorder %s21, 1
      %p86 = por %p84, %p85
      %p88 = scmp.ne.s32.totalorder %s73, %s87
      %p89 = scmp.eq.s32.totalorder %s21, 0
      %p90 = por %p88, %p89
      %s92 = sadd.s32 %s91, 1
      %p95 = scmp.eq.s32.totalorder %s15, 1
      %p96 = scmp.ne.s32.totalorder %s91, %s93
      %p97 = scmp.eq.s32.totalorder %s15, 0
      %p98 = por %p96, %p97
      %p99 = scmp.ne.s32.totalorder %s91, %s93
      %p100 = scmp.eq.s32.totalorder %s20, 1
      %p101 = por %p99, %p100
      %p102 = scmp.ne.s32.totalorder %s93, %s94
      %p103 = scmp.eq.s32.totalorder %s20, 0
      %p104 = por %p102, %p103
      %p105 = scmp.ne.s32.totalorder %s93, %s94
      %p106 = scmp.eq.s32.totalorder %s21, 1
      %p107 = por %p105, %p106
      %p109 = scmp.ne.s32.totalorder %s94, %s108
      %p110 = scmp.eq.s32.totalorder %s21, 0
      %p111 = por %p109, %p110
      %s113 = sadd.s32 %s112, 1
      %p116 = scmp.eq.s32.totalorder %s15, 1
      %p117 = scmp.ne.s32.totalorder %s112, %s114
      %p118 = scmp.eq.s32.totalorder %s15, 0
      %p119 = por %p117, %p118
      %p120 = scmp.ne.s32.totalorder %s112, %s114
      %p121 = scmp.eq.s32.totalorder %s20, 1
      %p122 = por %p120, %p121
      %p123 = scmp.ne.s32.totalorder %s114, %s115
      %p124 = scmp.eq.s32.totalorder %s20, 0
      %p125 = por %p123, %p124
      %p126 = scmp.ne.s32.totalorder %s114, %s115
      %p127 = scmp.eq.s32.totalorder %s21, 1
      %p128 = por %p126, %p127
      %p130 = scmp.ne.s32.totalorder %s115, %s129
      %p131 = scmp.eq.s32.totalorder %s21, 0
      %p132 = por %p130, %p131
      %s134 = sadd.s32 %s133, 1
      %p137 = scmp.eq.s32.totalorder %s15, 1
      %p138 = scmp.ne.s32.totalorder %s133, %s135
      %p139 = scmp.eq.s32.totalorder %s15, 0
      %p140 = por %p138, %p139
      %p141 = scmp.ne.s32.totalorder %s133, %s135
      %p142 = scmp.eq.s32.totalorder %s20, 1
      %p143 = por %p141, %p142
      %p144 = scmp.ne.s32.totalorder %s135, %s136
      %p145 = scmp.eq.s32.totalorder %s20, 0
      %p146 = por %p144, %p145
      %p147 = scmp.ne.s32.totalorder %s135, %s136
      %p148 = scmp.eq.s32.totalorder %s21, 1
      %p149 = por %p147, %p148
      %p151 = scmp.ne.s32.totalorder %s136, %s150
      %p152 = scmp.eq.s32.totalorder %s21, 0
      %p153 = por %p151, %p152
      %s154 = ssub.s32 %s15, %s22
      %p155 = scmp.eq.s32.totalorder %s154, 0
      %s157 = sadd.s32 %s156, 1
      %s158 = scalar_select %p155, %s156, %s157
      %p161 = pneg %p155
      %p162 = scmp.eq.s32.totalorder %s15, 1
      %p163 = por %p161, %p162
      %p164 = scmp.ne.s32.totalorder %s156, %s159
      %p165 = scmp.eq.s32.totalorder %s15, 0
      %p166 = por %p164, %p165
      %p167 = scmp.ne.s32.totalorder %s156, %s159
      %p168 = scmp.eq.s32.totalorder %s20, 1
      %p169 = por %p167, %p168
      %p170 = scmp.ne.s32.totalorder %s159, %s160
      %p171 = scmp.eq.s32.totalorder %s20, 0
      %p172 = por %p170, %p171
      %p173 = scmp.ne.s32.totalorder %s159, %s160
      %p174 = scmp.eq.s32.totalorder %s21, 1
      %p175 = por %p173, %p174
      %p177 = scmp.ne.s32.totalorder %s160, %s176
      %p178 = scmp.eq.s32.totalorder %s21, 0
      %p179 = por %p177, %p178
      %p180 = scmp.le.s32.totalorder 1, %s15
      %p181 = scmp.lt.s32.totalorder %s15, 3
      %p182 = pnand %p180, %p181
      %p183 = pneg %p182
      // Predicated region
      $region9: #{tpu_custom_call.1} parent=5 // pred_check
        _
      $region10: #{tpu_custom_call.1} parent=5 // pred_check_branch
        %185 = sbr.rel (%p182) target = $region12
      $region11: #{tpu_custom_call.1} parent=5 // pred_region
        %s186 = ssub.s32 %s15, 1
        // Predicated region
        $region13: #{tpu_custom_call.1} parent=11 // pred_check
          %p187 = pneg %p62
        $region14: #{tpu_custom_call.1} parent=11 // pred_check_branch
          %189 = sbr.rel (%p187) target = $region16
        $region15: #{tpu_custom_call.1} parent=11 // pred_region
          _
        $region16: #{tpu_custom_call.1} parent=11 // pred_fallthru
          _
        // Predicated region
        $region17: #{tpu_custom_call.1} parent=11 // pred_check
          %p190 = pneg %p83
        $region18: #{tpu_custom_call.1} parent=11 // pred_check_branch
          %192 = sbr.rel (%p190) target = $region20
        $region19: #{tpu_custom_call.1} parent=11 // pred_region
          _
        $region20: #{tpu_custom_call.1} parent=11 // pred_fallthru
          _
        // Predicated region
        $region21: #{tpu_custom_call.1} parent=11 // pred_check
          %p193 = pneg %p104
        $region22: #{tpu_custom_call.1} parent=11 // pred_check_branch
          %195 = sbr.rel (%p193) target = $region24
        $region23: #{tpu_custom_call.1} parent=11 // pred_region
          _
        $region24: #{tpu_custom_call.1} parent=11 // pred_fallthru
          _
        // Predicated region
        $region25: #{tpu_custom_call.1} parent=11 // pred_check
          %p196 = pneg %p125
        $region26: #{tpu_custom_call.1} parent=11 // pred_check_branch
          %198 = sbr.rel (%p196) target = $region28
        $region27: #{tpu_custom_call.1} parent=11 // pred_region
          _
        $region28: #{tpu_custom_call.1} parent=11 // pred_fallthru
          _
        // Predicated region
        $region29: #{tpu_custom_call.1} parent=11 // pred_check
          %p199 = pneg %p146
        $region30: #{tpu_custom_call.1} parent=11 // pred_check_branch
          %201 = sbr.rel (%p199) target = $region32
        $region31: #{tpu_custom_call.1} parent=11 // pred_region
          _
        $region32: #{tpu_custom_call.1} parent=11 // pred_fallthru
          _
      $region12: #{tpu_custom_call.1} parent=5 // pred_fallthru
        _
      %p202 = scmp.lt.s32.totalorder %s15, 2
      // Predicated region
      $region33: #{tpu_custom_call.1} parent=5 // pred_check
        %p203 = pneg %p202
      $region34: #{tpu_custom_call.1} parent=5 // pred_check_branch
        %205 = sbr.rel (%p203) target = $region36
      $region35: #{tpu_custom_call.1} parent=5 // pred_region
        // Predicated region
        $region37: #{tpu_custom_call.1} parent=35 // pred_check
          %p206 = pneg %p35
        $region38: #{tpu_custom_call.1} parent=35 // pred_check_branch
          %208 = sbr.rel (%p206) target = $region40
        $region39: #{tpu_custom_call.1} parent=35 // pred_region
          %p209 = scmp.lt.s32.totalorder %s15, 1
          %s210 = scalar_select %p209, %s15, 1
          %s211 = smul.addr %s210, 8
          %s212 = scalar_lea.vmem %s0, %s211
        $region40: #{tpu_custom_call.1} parent=35 // pred_fallthru
          _
      $region36: #{tpu_custom_call.1} parent=5 // pred_fallthru
        _
      %p213 = scmp.le.s32.totalorder 1, %s15
      %p214 = scmp.lt.s32.totalorder %s15, 3
      %p215 = pnand %p213, %p214
      %p216 = pneg %p215
      // Predicated region
      $region41: #{tpu_custom_call.1} parent=5 // pred_check
        _
      $region42: #{tpu_custom_call.1} parent=5 // pred_check_branch
        %218 = sbr.rel (%p215) target = $region44
      $region43: #{tpu_custom_call.1} parent=5 // pred_region
        %s219 = ssub.s32 %s15, 1
        %p220 = scmp.lt.s32.totalorder %s20, 1
        %s221 = scalar_select %p220, %s20, 1
        %s222 = smul.addr %s221, 8
        %s223 = scalar_lea.vmem %s0, %s222
        %p224 = pneg %p41
        %p225 = pneg %p38
        %p226 = pneg %p62
        %p227 = pneg %p59
        %p228 = pneg %p83
        %p229 = pneg %p80
        %p230 = pneg %p104
        %p231 = pneg %p101
        %p232 = pneg %p125
        %p233 = pneg %p122
        %p234 = pneg %p146
        %p235 = pneg %p143
        %p236 = pneg %p172
        %p237 = pneg %p169
        %s238 = sand.u32 %s159, 1
        %s239 = scalar_lea.sflag [#allocation6], %s238
        %s240 = sand.u32 %s159, 1
        %s241 = smul.addr %s240, 8
        %s242 = scalar_lea.vmem [#allocation5], %s241
        %p243 = scmp.lt.s32.totalorder %s20, 1
        %s244 = scalar_select %p243, %s20, 1
        %s245 = smul.addr %s244, 8
        %s246 = scalar_lea.vmem %s0, %s245
        %v247 = vld [vmem:[%s4] sm:$0xff]
        %v248 = vld [vmem:[%s4 + $0x8] sm:$0xff]
        %v249 = vld [vmem:[%s4 + $0x10] sm:$0xff]
        %v250 = vld [vmem:[%s4 + $0x18] sm:$0xff]
        %v251 = vld [vmem:[%s4 + $0x20] sm:$0xff]
        %v252 = vld [vmem:[%s4 + $0x28] sm:$0xff]
        %v253 = vld [vmem:[%s4 + $0x30] sm:$0xff]
        %v254 = vld [vmem:[%s4 + $0x38] sm:$0xff]
        %v255 = vld [vmem:[%s3] sm:$0xff]
        %v256 = vld [vmem:[%s3 + $0x8] sm:$0xff]
        %v257 = vld [vmem:[%s3 + $0x10] sm:$0xff]
        %v258 = vld [vmem:[%s3 + $0x18] sm:$0xff]
        %v259 = vld [vmem:[%s5] sm:$0xff]
        %v260 = vld [vmem:[%s5 + $0x8] sm:$0xff]
        %v261 = vld [vmem:[%s5 + $0x10] sm:$0xff]
        %v262 = vld [vmem:[%s5 + $0x18] sm:$0xff]
        %v263 = vld [vmem:[%s5 + $0x20] sm:$0xff]
        %v264 = vld [vmem:[%s5 + $0x28] sm:$0xff]
        %v265 = vld [vmem:[%s5 + $0x30] sm:$0xff]
        %v266 = vld [vmem:[%s5 + $0x38] sm:$0xff]
        %268 = vset.pattern.permute.xlu0 0
        %269 = vperm.xlu0 %268, %v259
        %v270 = vpop.permute.xlu0 %269
        %273 = vset.pattern.permute.xlu0 0
        %274 = vperm.xlu0 %273, %v260
        %v275 = vpop.permute.xlu0 %274
        %278 = vset.pattern.permute.xlu0 0
        %279 = vperm.xlu0 %278, %v261
        %v280 = vpop.permute.xlu0 %279
        %283 = vset.pattern.permute.xlu0 0
        %284 = vperm.xlu0 %283, %v262
        %v285 = vpop.permute.xlu0 %284
        %288 = vset.pattern.permute.xlu0 0
        %289 = vperm.xlu0 %288, %v263
        %v290 = vpop.permute.xlu0 %289
        %293 = vset.pattern.permute.xlu0 0
        %294 = vperm.xlu0 %293, %v264
        %v295 = vpop.permute.xlu0 %294
        %298 = vset.pattern.permute.xlu0 0
        %299 = vperm.xlu0 %298, %v265
        %v300 = vpop.permute.xlu0 %299
        %303 = vset.pattern.permute.xlu0 0
        %304 = vperm.xlu0 %303, %v266
        %v305 = vpop.permute.xlu0 %304
        %vm307 = vcmask 261120
        %v309 = vsel %vm307, %v247, 0
        %v312 = vsel %vm307, %v248, 0
        %v315 = vsel %vm307, %v249, 0
        %v318 = vsel %vm307, %v250, 0
        %v321 = vsel %vm307, %v251, 0
        %v324 = vsel %vm307, %v252, 0
        %v327 = vsel %vm307, %v253, 0
        %v330 = vsel %vm307, %v254, 0
        %332 = vmatprep.subr.mxu0 0.0
        %333 = vmatpush1.msra.mxu0 0.0
        %334 = vmatprep.subr.mxu0 0.0
        %335 = vmatpush1.msra.mxu0 0.0
        %336 = vmatprep.subr.mxu0 0.0
        %337 = vmatpush1.msra.mxu0 0.0
        %338 = vmatprep.subr.mxu0 0.0
        %339 = vmatpush1.msra.mxu0 0.0
        %340 = vmatprep.subr.mxu0 0.0
        %341 = vmatpush1.msra.mxu0 0.0
        %342 = vmatprep.subr.mxu0 0.0
        %343 = vmatpush1.msra.mxu0 0.0
        %344 = vmatprep.subr.mxu0 0.0
        %345 = vmatpush1.msra.mxu0 0.0
        %346 = vmatprep.subr.mxu0 0.0
        %347 = vmatpush1.msra.mxu0 0.0
        %348 = vmatprep.subr.mxu0 0.0
        %349 = vmatpush1.msra.mxu0 0.0
        %350 = vmatprep.subr.mxu0 0.0
        %351 = vmatpush1.msra.mxu0 0.0
        %352 = vmatprep.subr.mxu0 0.0
        %353 = vmatpush1.msra.mxu0 0.0
        %354 = vmatprep.subr.mxu0 0.0
        %355 = vmatpush1.msra.mxu0 0.0
        %356 = vmatprep.subr.mxu0 0.0
        %357 = vmatpush1.msra.mxu0 %v258
        %358 = vmatprep.subr.mxu0 0.0
        %359 = vmatpush1.msra.mxu0 %v257
        %360 = vmatprep.subr.mxu0 0.0
        %361 = vmatpush1.msra.mxu0 %v256
        %362 = vmatprep.subr.mxu0 0.0
        %363 = vmatpush1.msra.mxu0 %v255
        %364 = vmatprep.subr.mxu0 0.0
        %365 = vmatpush2.msra.mxu0 0.0
        %366 = vmatprep.subr.mxu0 0.0
        %367 = vmatpush2.msra.mxu0 0.0
        %368 = vmatprep.subr.mxu0 0.0
        %369 = vmatpush2.msra.mxu0 0.0
        %370 = vmatprep.subr.mxu0 0.0
        %371 = vmatpush2.msra.mxu0 0.0
        %372 = vmatprep.subr.mxu0 0.0
        %373 = vmatpush2.msra.mxu0 0.0
        %374 = vmatprep.subr.mxu0 0.0
        %375 = vmatpush2.msra.mxu0 0.0
        %376 = vmatprep.subr.mxu0 0.0
        %377 = vmatpush2.msra.mxu0 0.0
        %378 = vmatprep.subr.mxu0 0.0
        %379 = vmatpush2.msra.mxu0 0.0
        %380 = vmatprep.subr.mxu0 0.0
        %381 = vmatpush2.msra.mxu0 0.0
        %382 = vmatprep.subr.mxu0 0.0
        %383 = vmatpush2.msra.mxu0 0.0
        %384 = vmatprep.subr.mxu0 0.0
        %385 = vmatpush2.msra.mxu0 0.0
        %386 = vmatprep.subr.mxu0 0.0
        %387 = vmatpush2.msra.mxu0 0.0
        %388 = vmatprep.subr.mxu0 0.0
        %389 = vmatpush2.msra.mxu0 0.0
        %390 = vmatprep.subr.mxu0 0.0
        %391 = vmatpush2.msra.mxu0 0.0
        %392 = vmatprep.subr.mxu0 0.0
        %393 = vmatpush2.msra.mxu0 0.0
        %394 = vmatprep.subr.mxu0 0.0
        %395 = vmatpush2.msra.mxu0 0.0
        %396 = vmatprep.mubr.f32.mxu0 0.0
        %397 = vmatmul.mubr.f32.gmra.mxu0 %v309
        %v398 = vpop.f32.mrf.mxu0
        %v399 = vadd.f32 %v270, %v398
        %v400 = vpop.f32.mrf.mxu0
        %401 = vmatprep.mubr.f32.mxu0 0.0
        %402 = vmatmul.mubr.f32.gmra.mxu0 %v312
        %v403 = vpop.f32.mrf.mxu0
        %v404 = vadd.f32 %v275, %v403
        %v405 = vpop.f32.mrf.mxu0
        %406 = vmatprep.mubr.f32.mxu0 0.0
        %407 = vmatmul.mubr.f32.gmra.mxu0 %v315
        %v408 = vpop.f32.mrf.mxu0
        %v409 = vadd.f32 %v280, %v408
        %v410 = vpop.f32.mrf.mxu0
        %411 = vmatprep.mubr.f32.mxu0 0.0
        %412 = vmatmul.mubr.f32.gmra.mxu0 %v318
        %v413 = vpop.f32.mrf.mxu0
        %v414 = vadd.f32 %v285, %v413
        %v415 = vpop.f32.mrf.mxu0
        %416 = vmatprep.mubr.f32.mxu0 0.0
        %417 = vmatmul.mubr.f32.gmra.mxu0 %v321
        %v418 = vpop.f32.mrf.mxu0
        %v419 = vadd.f32 %v290, %v418
        %v420 = vpop.f32.mrf.mxu0
        %421 = vmatprep.mubr.f32.mxu0 0.0
        %422 = vmatmul.mubr.f32.gmra.mxu0 %v324
        %v423 = vpop.f32.mrf.mxu0
        %v424 = vadd.f32 %v295, %v423
        %v425 = vpop.f32.mrf.mxu0
        %426 = vmatprep.mubr.f32.mxu0 0.0
        %427 = vmatmul.mubr.f32.gmra.mxu0 %v327
        %v428 = vpop.f32.mrf.mxu0
        %v429 = vadd.f32 %v300, %v428
        %v430 = vpop.f32.mrf.mxu0
        %431 = vmatprep.mubr.f32.mxu0 0.0
        %432 = vmatmul.mubr.f32.gmra.mxu0 %v330
        %v433 = vpop.f32.mrf.mxu0
        %v434 = vadd.f32 %v305, %v433
        %v435 = vpop.f32.mrf.mxu0
        %436 = vdwg.mxu0
        %vm437 = vcmask 130048
        %438 = vst.msk [vmem:[#allocation3] sm:$0xff] %vm437, %v399
        %439 = vst.msk [vmem:[#allocation3 + $0x8] sm:$0xff] %vm437, %v404
        %440 = vst.msk [vmem:[#allocation3 + $0x10] sm:$0xff] %vm437, %v409
        %441 = vst.msk [vmem:[#allocation3 + $0x18] sm:$0xff] %vm437, %v414
        %442 = vst.msk [vmem:[#allocation4] sm:$0xff] %vm437, %v419
        %443 = vst.msk [vmem:[#allocation4 + $0x8] sm:$0xff] %vm437, %v424
        %444 = vst.msk [vmem:[#allocation4 + $0x10] sm:$0xff] %vm437, %v429
        %445 = vst.msk [vmem:[#allocation4 + $0x18] sm:$0xff] %vm437, %v434
        %v446 = vld [vmem:[%s246] sm:$0xff]
        %v447 = vld [vmem:[%s1] sm:$0xff]
        %v448 = vld [vmem:[%s1 + $0x8] sm:$0xff]
        %v449 = vld [vmem:[%s1 + $0x10] sm:$0xff]
        %v450 = vld [vmem:[%s1 + $0x18] sm:$0xff]
        %v451 = vld [vmem:[%s2] sm:$0x1]
        %v453 = vlaneseq
        %v454 = vshrl.u32 %v453, 7
        %v455 = vsub.s32 0, %v454
        %v456 = vrot.slane %v451, %v455
        %v459 = vsel %vm307, %v446, 0
        %461 = vmatprep.subr.mxu0 0.0
        %462 = vmatpush1.msra.mxu0 0.0
        %463 = vmatprep.subr.mxu0 0.0
        %464 = vmatpush1.msra.mxu0 0.0
        %465 = vmatprep.subr.mxu0 0.0
        %466 = vmatpush1.msra.mxu0 0.0
        %467 = vmatprep.subr.mxu0 0.0
        %468 = vmatpush1.msra.mxu0 0.0
        %469 = vmatprep.subr.mxu0 0.0
        %470 = vmatpush1.msra.mxu0 0.0
        %471 = vmatprep.subr.mxu0 0.0
        %472 = vmatpush1.msra.mxu0 0.0
        %473 = vmatprep.subr.mxu0 0.0
        %474 = vmatpush1.msra.mxu0 0.0
        %475 = vmatprep.subr.mxu0 0.0
        %476 = vmatpush1.msra.mxu0 0.0
        %477 = vmatprep.subr.mxu0 0.0
        %478 = vmatpush1.msra.mxu0 0.0
        %479 = vmatprep.subr.mxu0 0.0
        %480 = vmatpush1.msra.mxu0 0.0
        %481 = vmatprep.subr.mxu0 0.0
        %482 = vmatpush1.msra.mxu0 0.0
        %483 = vmatprep.subr.mxu0 0.0
        %484 = vmatpush1.msra.mxu0 0.0
        %485 = vmatprep.subr.mxu0 0.0
        %486 = vmatpush1.msra.mxu0 %v450
        %487 = vmatprep.subr.mxu0 0.0
        %488 = vmatpush1.msra.mxu0 %v449
        %489 = vmatprep.subr.mxu0 0.0
        %490 = vmatpush1.msra.mxu0 %v448
        %491 = vmatprep.subr.mxu0 0.0
        %492 = vmatpush1.msra.mxu0 %v447
        %493 = vmatprep.subr.mxu0 0.0
        %494 = vmatpush2.msra.mxu0 0.0
        %495 = vmatprep.subr.mxu0 0.0
        %496 = vmatpush2.msra.mxu0 0.0
        %497 = vmatprep.subr.mxu0 0.0
        %498 = vmatpush2.msra.mxu0 0.0
        %499 = vmatprep.subr.mxu0 0.0
        %500 = vmatpush2.msra.mxu0 0.0
        %501 = vmatprep.subr.mxu0 0.0
        %502 = vmatpush2.msra.mxu0 0.0
        %503 = vmatprep.subr.mxu0 0.0
        %504 = vmatpush2.msra.mxu0 0.0
        %505 = vmatprep.subr.mxu0 0.0
        %506 = vmatpush2.msra.mxu0 0.0
        %507 = vmatprep.subr.mxu0 0.0
        %508 = vmatpush2.msra.mxu0 0.0
        %509 = vmatprep.subr.mxu0 0.0
        %510 = vmatpush2.msra.mxu0 0.0
        %511 = vmatprep.subr.mxu0 0.0
        %512 = vmatpush2.msra.mxu0 0.0
        %513 = vmatprep.subr.mxu0 0.0
        %514 = vmatpush2.msra.mxu0 0.0
        %515 = vmatprep.subr.mxu0 0.0
        %516 = vmatpush2.msra.mxu0 0.0
        %517 = vmatprep.subr.mxu0 0.0
        %518 = vmatpush2.msra.mxu0 0.0
        %519 = vmatprep.subr.mxu0 0.0
        %520 = vmatpush2.msra.mxu0 0.0
        %521 = vmatprep.subr.mxu0 0.0
        %522 = vmatpush2.msra.mxu0 0.0
        %523 = vmatprep.subr.mxu0 0.0
        %524 = vmatpush2.msra.mxu0 0.0
        %525 = vmatprep.mubr.f32.mxu0 0.0
        %526 = vmatmul.mubr.f32.gmra.mxu0 %v459
        %v527 = vpop.f32.mrf.mxu0
        %v528 = vadd.f32 %v456, %v527
        %v529 = vpop.f32.mrf.mxu0
        %530 = vdwg.mxu0
        %531 = vst.msk [vmem:[#allocation2] sm:$0xff] %vm307, %v528
        %v532 = vld [vmem:[#allocation2] sm:$0xff]
        %v533 = vlaneseq
        %v534 = vshrl.u32 %v533, 7
        %v535 = vsub.s32 0, %v534
        %v536 = vrot.slane %v532, %v535
        %538 = vbcast.lane.b32.xlu0 %v536, 256
        %v539 = vpop.permute.xlu0 %538
        %s541 = sor.u32 256, 8
        %542 = vbcast.lane.b32.xlu0 %v536, %s541
        %v543 = vpop.permute.xlu0 %542
        %s545 = sor.u32 256, 16
        %546 = vbcast.lane.b32.xlu0 %v536, %s545
        %v547 = vpop.permute.xlu0 %546
        %s549 = sor.u32 256, 24
        %550 = vbcast.lane.b32.xlu0 %v536, %s549
        %v551 = vpop.permute.xlu0 %550
        %v552 = vlaneseq
        %v553 = vshrl.u32 %v552, 7
        %v554 = vsub.s32 1, %v553
        %v555 = vrot.slane %v532, %v554
        %557 = vbcast.lane.b32.xlu0 %v555, 256
        %v558 = vpop.permute.xlu0 %557
        %s560 = sor.u32 256, 8
        %561 = vbcast.lane.b32.xlu0 %v555, %s560
        %v562 = vpop.permute.xlu0 %561
        %s564 = sor.u32 256, 16
        %565 = vbcast.lane.b32.xlu0 %v555, %s564
        %v566 = vpop.permute.xlu0 %565
        %s568 = sor.u32 256, 24
        %569 = vbcast.lane.b32.xlu0 %v555, %s568
        %v570 = vpop.permute.xlu0 %569
        %v571 = vlaneseq
        %v572 = vshrl.u32 %v571, 7
        %v573 = vsub.s32 2, %v572
        %v574 = vrot.slane %v532, %v573
        %576 = vbcast.lane.b32.xlu0 %v574, 256
        %v577 = vpop.permute.xlu0 %576
        %s579 = sor.u32 256, 8
        %580 = vbcast.lane.b32.xlu0 %v574, %s579
        %v581 = vpop.permute.xlu0 %580
        %s583 = sor.u32 256, 16
        %584 = vbcast.lane.b32.xlu0 %v574, %s583
        %v585 = vpop.permute.xlu0 %584
        %s587 = sor.u32 256, 24
        %588 = vbcast.lane.b32.xlu0 %v574, %s587
        %v589 = vpop.permute.xlu0 %588
        %v590 = vlaneseq
        %v591 = vshrl.u32 %v590, 7
        %v592 = vsub.s32 3, %v591
        %v593 = vrot.slane %v532, %v592
        %595 = vbcast.lane.b32.xlu0 %v593, 256
        %v596 = vpop.permute.xlu0 %595
        %s598 = sor.u32 256, 8
        %599 = vbcast.lane.b32.xlu0 %v593, %s598
        %v600 = vpop.permute.xlu0 %599
        %s602 = sor.u32 256, 16
        %603 = vbcast.lane.b32.xlu0 %v593, %s602
        %v604 = vpop.permute.xlu0 %603
        %s606 = sor.u32 256, 24
        %607 = vbcast.lane.b32.xlu0 %v593, %s606
        %v608 = vpop.permute.xlu0 %607
        %v609 = vlaneseq
        %v610 = vshrl.u32 %v609, 7
        %v611 = vsub.s32 4, %v610
        %v612 = vrot.slane %v532, %v611
        %614 = vbcast.lane.b32.xlu0 %v612, 256
        %v615 = vpop.permute.xlu0 %614
        %s617 = sor.u32 256, 8
        %618 = vbcast.lane.b32.xlu0 %v612, %s617
        %v619 = vpop.permute.xlu0 %618
        %s621 = sor.u32 256, 16
        %622 = vbcast.lane.b32.xlu0 %v612, %s621
        %v623 = vpop.permute.xlu0 %622
        %s625 = sor.u32 256, 24
        %626 = vbcast.lane.b32.xlu0 %v612, %s625
        %v627 = vpop.permute.xlu0 %626
        %v628 = vlaneseq
        %v629 = vshrl.u32 %v628, 7
        %v630 = vsub.s32 5, %v629
        %v631 = vrot.slane %v532, %v630
        %633 = vbcast.lane.b32.xlu0 %v631, 256
        %v634 = vpop.permute.xlu0 %633
        %s636 = sor.u32 256, 8
        %637 = vbcast.lane.b32.xlu0 %v631, %s636
        %v638 = vpop.permute.xlu0 %637
        %s640 = sor.u32 256, 16
        %641 = vbcast.lane.b32.xlu0 %v631, %s640
        %v642 = vpop.permute.xlu0 %641
        %s644 = sor.u32 256, 24
        %645 = vbcast.lane.b32.xlu0 %v631, %s644
        %v646 = vpop.permute.xlu0 %645
        %v647 = vlaneseq
        %v648 = vshrl.u32 %v647, 7
        %v649 = vsub.s32 6, %v648
        %v650 = vrot.slane %v532, %v649
        %652 = vbcast.lane.b32.xlu0 %v650, 256
        %v653 = vpop.permute.xlu0 %652
        %s655 = sor.u32 256, 8
        %656 = vbcast.lane.b32.xlu0 %v650, %s655
        %v657 = vpop.permute.xlu0 %656
        %s659 = sor.u32 256, 16
        %660 = vbcast.lane.b32.xlu0 %v650, %s659
        %v661 = vpop.permute.xlu0 %660
        %s663 = sor.u32 256, 24
        %664 = vbcast.lane.b32.xlu0 %v650, %s663
        %v665 = vpop.permute.xlu0 %664
        %v666 = vlaneseq
        %v667 = vshrl.u32 %v666, 7
        %v668 = vsub.s32 7, %v667
        %v669 = vrot.slane %v532, %v668
        %671 = vbcast.lane.b32.xlu0 %v669, 256
        %v672 = vpop.permute.xlu0 %671
        %s674 = sor.u32 256, 8
        %675 = vbcast.lane.b32.xlu0 %v669, %s674
        %v676 = vpop.permute.xlu0 %675
        %s678 = sor.u32 256, 16
        %679 = vbcast.lane.b32.xlu0 %v669, %s678
        %v680 = vpop.permute.xlu0 %679
        %s682 = sor.u32 256, 24
        %683 = vbcast.lane.b32.xlu0 %v669, %s682
        %v684 = vpop.permute.xlu0 %683
        %v685 = vld [vmem:[#allocation3] sm:$0xff]
        %v686 = vld [vmem:[#allocation3 + $0x8] sm:$0xff]
        %v687 = vld [vmem:[#allocation3 + $0x10] sm:$0xff]
        %v688 = vld [vmem:[#allocation3 + $0x18] sm:$0xff]
        %v689 = vld [vmem:[#allocation4] sm:$0xff]
        %v690 = vld [vmem:[#allocation4 + $0x8] sm:$0xff]
        %v691 = vld [vmem:[#allocation4 + $0x10] sm:$0xff]
        %v692 = vld [vmem:[#allocation4 + $0x18] sm:$0xff]
        %v693 = vmul.f32 %v539, %v685
        %v694 = vmul.f32 %v543, %v686
        %v695 = vmul.f32 %v547, %v687
        %v696 = vmul.f32 %v551, %v688
        %v697 = vmul.f32 %v558, %v685
        %v698 = vmul.f32 %v562, %v686
        %v699 = vmul.f32 %v566, %v687
        %v700 = vmul.f32 %v570, %v688
        %v701 = vmul.f32 %v577, %v685
        %v702 = vmul.f32 %v581, %v686
        %v703 = vmul.f32 %v585, %v687
        %v704 = vmul.f32 %v589, %v688
        %v705 = vmul.f32 %v596, %v685
        %v706 = vmul.f32 %v600, %v686
        %v707 = vmul.f32 %v604, %v687
        %v708 = vmul.f32 %v608, %v688
        %v709 = vmul.f32 %v615, %v685
        %v710 = vmul.f32 %v619, %v686
        %v711 = vmul.f32 %v623, %v687
        %v712 = vmul.f32 %v627, %v688
        %v713 = vmul.f32 %v634, %v685
        %v714 = vmul.f32 %v638, %v686
        %v715 = vmul.f32 %v642, %v687
        %v716 = vmul.f32 %v646, %v688
        %v717 = vmul.f32 %v653, %v685
        %v718 = vmul.f32 %v657, %v686
        %v719 = vmul.f32 %v661, %v687
        %v720 = vmul.f32 %v665, %v688
        %v721 = vmul.f32 %v672, %v685
        %v722 = vmul.f32 %v676, %v686
        %v723 = vmul.f32 %v680, %v687
        %v724 = vmul.f32 %v684, %v688
        %v725 = vsel %vm437, %v693, -inf
        %726 = vmax.xlane.f32.xlu0 %v725
        %v727 = vpop.xlane.xlu0 %726
        %v728 = vsel %vm437, %v694, -inf
        %729 = vmax.xlane.f32.xlu0 %v728
        %v730 = vpop.xlane.xlu0 %729
        %v731 = vsel %vm437, %v695, -inf
        %732 = vmax.xlane.f32.xlu0 %v731
        %v733 = vpop.xlane.xlu0 %732
        %v734 = vsel %vm437, %v696, -inf
        %735 = vmax.xlane.f32.xlu0 %v734
        %v736 = vpop.xlane.xlu0 %735
        %v737 = vsel %vm437, %v697, -inf
        %738 = vmax.xlane.f32.xlu0 %v737
        %v739 = vpop.xlane.xlu0 %738
        %v740 = vsel %vm437, %v698, -inf
        %741 = vmax.xlane.f32.xlu0 %v740
        %v742 = vpop.xlane.xlu0 %741
        %v743 = vsel %vm437, %v699, -inf
        %744 = vmax.xlane.f32.xlu0 %v743
        %v745 = vpop.xlane.xlu0 %744
        %v746 = vsel %vm437, %v700, -inf
        %747 = vmax.xlane.f32.xlu0 %v746
        %v748 = vpop.xlane.xlu0 %747
        %v749 = vsel %vm437, %v701, -inf
        %750 = vmax.xlane.f32.xlu0 %v749
        %v751 = vpop.xlane.xlu0 %750
        %v752 = vsel %vm437, %v702, -inf
        %753 = vmax.xlane.f32.xlu0 %v752
        %v754 = vpop.xlane.xlu0 %753
        %v755 = vsel %vm437, %v703, -inf
        %756 = vmax.xlane.f32.xlu0 %v755
        %v757 = vpop.xlane.xlu0 %756
        %v758 = vsel %vm437, %v704, -inf
        %759 = vmax.xlane.f32.xlu0 %v758
        %v760 = vpop.xlane.xlu0 %759
        %v761 = vsel %vm437, %v705, -inf
        %762 = vmax.xlane.f32.xlu0 %v761
        %v763 = vpop.xlane.xlu0 %762
        %v764 = vsel %vm437, %v706, -inf
        %765 = vmax.xlane.f32.xlu0 %v764
        %v766 = vpop.xlane.xlu0 %765
        %v767 = vsel %vm437, %v707, -inf
        %768 = vmax.xlane.f32.xlu0 %v767
        %v769 = vpop.xlane.xlu0 %768
        %v770 = vsel %vm437, %v708, -inf
        %771 = vmax.xlane.f32.xlu0 %v770
        %v772 = vpop.xlane.xlu0 %771
        %v773 = vsel %vm437, %v709, -inf
        %774 = vmax.xlane.f32.xlu0 %v773
        %v775 = vpop.xlane.xlu0 %774
        %v776 = vsel %vm437, %v710, -inf
        %777 = vmax.xlane.f32.xlu0 %v776
        %v778 = vpop.xlane.xlu0 %777
        %v779 = vsel %vm437, %v711, -inf
        %780 = vmax.xlane.f32.xlu0 %v779
        %v781 = vpop.xlane.xlu0 %780
        %v782 = vsel %vm437, %v712, -inf
        %783 = vmax.xlane.f32.xlu0 %v782
        %v784 = vpop.xlane.xlu0 %783
        %v785 = vsel %vm437, %v713, -inf
        %786 = vmax.xlane.f32.xlu0 %v785
        %v787 = vpop.xlane.xlu0 %786
        %v788 = vsel %vm437, %v714, -inf
        %789 = vmax.xlane.f32.xlu0 %v788
        %v790 = vpop.xlane.xlu0 %789
        %v791 = vsel %vm437, %v715, -inf
        %792 = vmax.xlane.f32.xlu0 %v791
        %v793 = vpop.xlane.xlu0 %792
        %v794 = vsel %vm437, %v716, -inf
        %795 = vmax.xlane.f32.xlu0 %v794
        %v796 = vpop.xlane.xlu0 %795
        %v797 = vsel %vm437, %v717, -inf
        %798 = vmax.xlane.f32.xlu0 %v797
        %v799 = vpop.xlane.xlu0 %798
        %v800 = vsel %vm437, %v718, -inf
        %801 = vmax.xlane.f32.xlu0 %v800
        %v802 = vpop.xlane.xlu0 %801
        %v803 = vsel %vm437, %v719, -inf
        %804 = vmax.xlane.f32.xlu0 %v803
        %v805 = vpop.xlane.xlu0 %804
        %v806 = vsel %vm437, %v720, -inf
        %807 = vmax.xlane.f32.xlu0 %v806
        %v808 = vpop.xlane.xlu0 %807
        %v809 = vsel %vm437, %v721, -inf
        %810 = vmax.xlane.f32.xlu0 %v809
        %v811 = vpop.xlane.xlu0 %810
        %v812 = vsel %vm437, %v722, -inf
        %813 = vmax.xlane.f32.xlu0 %v812
        %v814 = vpop.xlane.xlu0 %813
        %v815 = vsel %vm437, %v723, -inf
        %816 = vmax.xlane.f32.xlu0 %v815
        %v817 = vpop.xlane.xlu0 %816
        %v818 = vsel %vm437, %v724, -inf
        %819 = vmax.xlane.f32.xlu0 %v818
        %v820 = vpop.xlane.xlu0 %819
        %v821 = vsub.f32 -inf, %v727
        %v822 = vsub.f32 -inf, %v730
        %v823 = vsub.f32 -inf, %v733
        %v824 = vsub.f32 -inf, %v736
        %v825 = vsub.f32 -inf, %v739
        %v826 = vsub.f32 -inf, %v742
        %v827 = vsub.f32 -inf, %v745
        %v828 = vsub.f32 -inf, %v748
        %v829 = vsub.f32 -inf, %v751
        %v830 = vsub.f32 -inf, %v754
        %v831 = vsub.f32 -inf, %v757
        %v832 = vsub.f32 -inf, %v760
        %v833 = vsub.f32 -inf, %v763
        %v834 = vsub.f32 -inf, %v766
        %v835 = vsub.f32 -inf, %v769
        %v836 = vsub.f32 -inf, %v772
        %v837 = vsub.f32 -inf, %v775
        %v838 = vsub.f32 -inf, %v778
        %v839 = vsub.f32 -inf, %v781
        %v840 = vsub.f32 -inf, %v784
        %v841 = vsub.f32 -inf, %v787
        %v842 = vsub.f32 -inf, %v790
        %v843 = vsub.f32 -inf, %v793
        %v844 = vsub.f32 -inf, %v796
        %v845 = vsub.f32 -inf, %v799
        %v846 = vsub.f32 -inf, %v802
        %v847 = vsub.f32 -inf, %v805
        %v848 = vsub.f32 -inf, %v808
        %v849 = vsub.f32 -inf, %v811
        %v850 = vsub.f32 -inf, %v814
        %v851 = vsub.f32 -inf, %v817
        %v852 = vsub.f32 -inf, %v820
        %v853 = vmul.f32 %v821, 1.442695
        %v854 = vpow.pop %v853
        %v855 = vmul.f32 %v822, 1.442695
        %v856 = vpow.pop %v855
        %v857 = vmul.f32 %v823, 1.442695
        %v858 = vpow.pop %v857
        %v859 = vmul.f32 %v824, 1.442695
        %v860 = vpow.pop %v859
        %v861 = vmul.f32 %v825, 1.442695
        %v862 = vpow.pop %v861
        %v863 = vmul.f32 %v826, 1.442695
        %v864 = vpow.pop %v863
        %v865 = vmul.f32 %v827, 1.442695
        %v866 = vpow.pop %v865
        %v867 = vmul.f32 %v828, 1.442695
        %v868 = vpow.pop %v867
        %v869 = vmul.f32 %v829, 1.442695
        %v870 = vpow.pop %v869
        %v871 = vmul.f32 %v830, 1.442695
        %v872 = vpow.pop %v871
        %v873 = vmul.f32 %v831, 1.442695
        %v874 = vpow.pop %v873
        %v875 = vmul.f32 %v832, 1.442695
        %v876 = vpow.pop %v875
        %v877 = vmul.f32 %v833, 1.442695
        %v878 = vpow.pop %v877
        %v879 = vmul.f32 %v834, 1.442695
        %v880 = vpow.pop %v879
        %v881 = vmul.f32 %v835, 1.442695
        %v882 = vpow.pop %v881
        %v883 = vmul.f32 %v836, 1.442695
        %v884 = vpow.pop %v883
        %v885 = vmul.f32 %v837, 1.442695
        %v886 = vpow.pop %v885
        %v887 = vmul.f32 %v838, 1.442695
        %v888 = vpow.pop %v887
        %v889 = vmul.f32 %v839, 1.442695
        %v890 = vpow.pop %v889
        %v891 = vmul.f32 %v840, 1.442695
        %v892 = vpow.pop %v891
        %v893 = vmul.f32 %v841, 1.442695
        %v894 = vpow.pop %v893
        %v895 = vmul.f32 %v842, 1.442695
        %v896 = vpow.pop %v895
        %v897 = vmul.f32 %v843, 1.442695
        %v898 = vpow.pop %v897
        %v899 = vmul.f32 %v844, 1.442695
        %v900 = vpow.pop %v899
        %v901 = vmul.f32 %v845, 1.442695
        %v902 = vpow.pop %v901
        %v903 = vmul.f32 %v846, 1.442695
        %v904 = vpow.pop %v903
        %v905 = vmul.f32 %v847, 1.442695
        %v906 = vpow.pop %v905
        %v907 = vmul.f32 %v848, 1.442695
        %v908 = vpow.pop %v907
        %v909 = vmul.f32 %v849, 1.442695
        %v910 = vpow.pop %v909
        %v911 = vmul.f32 %v850, 1.442695
        %v912 = vpow.pop %v911
        %v913 = vmul.f32 %v851, 1.442695
        %v914 = vpow.pop %v913
        %v915 = vmul.f32 %v852, 1.442695
        %v916 = vpow.pop %v915
        %v917 = vsub.f32 %v693, %v727
        %v918 = vsub.f32 %v694, %v730
        %v919 = vsub.f32 %v695, %v733
        %v920 = vsub.f32 %v696, %v736
        %v921 = vsub.f32 %v697, %v739
        %v922 = vsub.f32 %v698, %v742
        %v923 = vsub.f32 %v699, %v745
        %v924 = vsub.f32 %v700, %v748
        %v925 = vsub.f32 %v701, %v751
        %v926 = vsub.f32 %v702, %v754
        %v927 = vsub.f32 %v703, %v757
        %v928 = vsub.f32 %v704, %v760
        %v929 = vsub.f32 %v705, %v763
        %v930 = vsub.f32 %v706, %v766
        %v931 = vsub.f32 %v707, %v769
        %v932 = vsub.f32 %v708, %v772
        %v933 = vsub.f32 %v709, %v775
        %v934 = vsub.f32 %v710, %v778
        %v935 = vsub.f32 %v711, %v781
        %v936 = vsub.f32 %v712, %v784
        %v937 = vsub.f32 %v713, %v787
        %v938 = vsub.f32 %v714, %v790
        %v939 = vsub.f32 %v715, %v793
        %v940 = vsub.f32 %v716, %v796
        %v941 = vsub.f32 %v717, %v799
        %v942 = vsub.f32 %v718, %v802
        %v943 = vsub.f32 %v719, %v805
        %v944 = vsub.f32 %v720, %v808
        %v945 = vsub.f32 %v721, %v811
        %v946 = vsub.f32 %v722, %v814
        %v947 = vsub.f32 %v723, %v817
        %v948 = vsub.f32 %v724, %v820
        %v949 = vmul.f32 %v917, 1.442695
        %v950 = vpow.pop %v949
        %v951 = vmul.f32 %v918, 1.442695
        %v952 = vpow.pop %v951
        %v953 = vmul.f32 %v919, 1.442695
        %v954 = vpow.pop %v953
        %v955 = vmul.f32 %v920, 1.442695
        %v956 = vpow.pop %v955
        %v957 = vmul.f32 %v921, 1.442695
        %v958 = vpow.pop %v957
        %v959 = vmul.f32 %v922, 1.442695
        %v960 = vpow.pop %v959
        %v961 = vmul.f32 %v923, 1.442695
        %v962 = vpow.pop %v961
        %v963 = vmul.f32 %v924, 1.442695
        %v964 = vpow.pop %v963
        %v965 = vmul.f32 %v925, 1.442695
        %v966 = vpow.pop %v965
        %v967 = vmul.f32 %v926, 1.442695
        %v968 = vpow.pop %v967
        %v969 = vmul.f32 %v927, 1.442695
        %v970 = vpow.pop %v969
        %v971 = vmul.f32 %v928, 1.442695
        %v972 = vpow.pop %v971
        %v973 = vmul.f32 %v929, 1.442695
        %v974 = vpow.pop %v973
        %v975 = vmul.f32 %v930, 1.442695
        %v976 = vpow.pop %v975
        %v977 = vmul.f32 %v931, 1.442695
        %v978 = vpow.pop %v977
        %v979 = vmul.f32 %v932, 1.442695
        %v980 = vpow.pop %v979
        %v981 = vmul.f32 %v933, 1.442695
        %v982 = vpow.pop %v981
        %v983 = vmul.f32 %v934, 1.442695
        %v984 = vpow.pop %v983
        %v985 = vmul.f32 %v935, 1.442695
        %v986 = vpow.pop %v985
        %v987 = vmul.f32 %v936, 1.442695
        %v988 = vpow.pop %v987
        %v989 = vmul.f32 %v937, 1.442695
        %v990 = vpow.pop %v989
        %v991 = vmul.f32 %v938, 1.442695
        %v992 = vpow.pop %v991
        %v993 = vmul.f32 %v939, 1.442695
        %v994 = vpow.pop %v993
        %v995 = vmul.f32 %v940, 1.442695
        %v996 = vpow.pop %v995
        %v997 = vmul.f32 %v941, 1.442695
        %v998 = vpow.pop %v997
        %v999 = vmul.f32 %v942, 1.442695
        %v1000 = vpow.pop %v999
        %v1001 = vmul.f32 %v943, 1.442695
        %v1002 = vpow.pop %v1001
        %v1003 = vmul.f32 %v944, 1.442695
        %v1004 = vpow.pop %v1003
        %v1005 = vmul.f32 %v945, 1.442695
        %v1006 = vpow.pop %v1005
        %v1007 = vmul.f32 %v946, 1.442695
        %v1008 = vpow.pop %v1007
        %v1009 = vmul.f32 %v947, 1.442695
        %v1010 = vpow.pop %v1009
        %v1011 = vmul.f32 %v948, 1.442695
        %v1012 = vpow.pop %v1011
        %v1013 = vmul.f32 %v854, 0.0
        %v1014 = vmul.f32 %v856, 0.0
        %v1015 = vmul.f32 %v858, 0.0
        %v1016 = vmul.f32 %v860, 0.0
        %v1017 = vmul.f32 %v862, 0.0
        %v1018 = vmul.f32 %v864, 0.0
        %v1019 = vmul.f32 %v866, 0.0
        %v1020 = vmul.f32 %v868, 0.0
        %v1021 = vmul.f32 %v870, 0.0
        %v1022 = vmul.f32 %v872, 0.0
        %v1023 = vmul.f32 %v874, 0.0
        %v1024 = vmul.f32 %v876, 0.0
        %v1025 = vmul.f32 %v878, 0.0
        %v1026 = vmul.f32 %v880, 0.0
        %v1027 = vmul.f32 %v882, 0.0
        %v1028 = vmul.f32 %v884, 0.0
        %v1029 = vmul.f32 %v886, 0.0
        %v1030 = vmul.f32 %v888, 0.0
        %v1031 = vmul.f32 %v890, 0.0
        %v1032 = vmul.f32 %v892, 0.0
        %v1033 = vmul.f32 %v894, 0.0
        %v1034 = vmul.f32 %v896, 0.0
        %v1035 = vmul.f32 %v898, 0.0
        %v1036 = vmul.f32 %v900, 0.0
        %v1037 = vmul.f32 %v902, 0.0
        %v1038 = vmul.f32 %v904, 0.0
        %v1039 = vmul.f32 %v906, 0.0
        %v1040 = vmul.f32 %v908, 0.0
        %v1041 = vmul.f32 %v910, 0.0
        %v1042 = vmul.f32 %v912, 0.0
        %v1043 = vmul.f32 %v914, 0.0
        %v1044 = vmul.f32 %v916, 0.0
        %v1045 = vsel %vm437, %v950, 0.0
        %1046 = vadd.xlane.f32.xlu0 %v1045
        %v1047 = vpop.xlane.xlu0 %1046
        %v1048 = vsel %vm437, %v952, 0.0
        %1049 = vadd.xlane.f32.xlu0 %v1048
        %v1050 = vpop.xlane.xlu0 %1049
        %v1051 = vsel %vm437, %v954, 0.0
        %1052 = vadd.xlane.f32.xlu0 %v1051
        %v1053 = vpop.xlane.xlu0 %1052
        %v1054 = vsel %vm437, %v956, 0.0
        %1055 = vadd.xlane.f32.xlu0 %v1054
        %v1056 = vpop.xlane.xlu0 %1055
        %v1057 = vsel %vm437, %v958, 0.0
        %1058 = vadd.xlane.f32.xlu0 %v1057
        %v1059 = vpop.xlane.xlu0 %1058
        %v1060 = vsel %vm437, %v960, 0.0
        %1061 = vadd.xlane.f32.xlu0 %v1060
        %v1062 = vpop.xlane.xlu0 %1061
        %v1063 = vsel %vm437, %v962, 0.0
        %1064 = vadd.xlane.f32.xlu0 %v1063
        %v1065 = vpop.xlane.xlu0 %1064
        %v1066 = vsel %vm437, %v964, 0.0
        %1067 = vadd.xlane.f32.xlu0 %v1066
        %v1068 = vpop.xlane.xlu0 %1067
        %v1069 = vsel %vm437, %v966, 0.0
        %1070 = vadd.xlane.f32.xlu0 %v1069
        %v1071 = vpop.xlane.xlu0 %1070
        %v1072 = vsel %vm437, %v968, 0.0
        %1073 = vadd.xlane.f32.xlu0 %v1072
        %v1074 = vpop.xlane.xlu0 %1073
        %v1075 = vsel %vm437, %v970, 0.0
        %1076 = vadd.xlane.f32.xlu0 %v1075
        %v1077 = vpop.xlane.xlu0 %1076
        %v1078 = vsel %vm437, %v972, 0.0
        %1079 = vadd.xlane.f32.xlu0 %v1078
        %v1080 = vpop.xlane.xlu0 %1079
        %v1081 = vsel %vm437, %v974, 0.0
        %1082 = vadd.xlane.f32.xlu0 %v1081
        %v1083 = vpop.xlane.xlu0 %1082
        %v1084 = vsel %vm437, %v976, 0.0
        %1085 = vadd.xlane.f32.xlu0 %v1084
        %v1086 = vpop.xlane.xlu0 %1085
        %v1087 = vsel %vm437, %v978, 0.0
        %1088 = vadd.xlane.f32.xlu0 %v1087
        %v1089 = vpop.xlane.xlu0 %1088
        %v1090 = vsel %vm437, %v980, 0.0
        %1091 = vadd.xlane.f32.xlu0 %v1090
        %v1092 = vpop.xlane.xlu0 %1091
        %v1093 = vsel %vm437, %v982, 0.0
        %1094 = vadd.xlane.f32.xlu0 %v1093
        %v1095 = vpop.xlane.xlu0 %1094
        %v1096 = vsel %vm437, %v984, 0.0
        %1097 = vadd.xlane.f32.xlu0 %v1096
        %v1098 = vpop.xlane.xlu0 %1097
        %v1099 = vsel %vm437, %v986, 0.0
        %1100 = vadd.xlane.f32.xlu0 %v1099
        %v1101 = vpop.xlane.xlu0 %1100
        %v1102 = vsel %vm437, %v988, 0.0
        %1103 = vadd.xlane.f32.xlu0 %v1102
        %v1104 = vpop.xlane.xlu0 %1103
        %v1105 = vsel %vm437, %v990, 0.0
        %1106 = vadd.xlane.f32.xlu0 %v1105
        %v1107 = vpop.xlane.xlu0 %1106
        %v1108 = vsel %vm437, %v992, 0.0
        %1109 = vadd.xlane.f32.xlu0 %v1108
        %v1110 = vpop.xlane.xlu0 %1109
        %v1111 = vsel %vm437, %v994, 0.0
        %1112 = vadd.xlane.f32.xlu0 %v1111
        %v1113 = vpop.xlane.xlu0 %1112
        %v1114 = vsel %vm437, %v996, 0.0
        %1115 = vadd.xlane.f32.xlu0 %v1114
        %v1116 = vpop.xlane.xlu0 %1115
        %v1117 = vsel %vm437, %v998, 0.0
        %1118 = vadd.xlane.f32.xlu0 %v1117
        %v1119 = vpop.xlane.xlu0 %1118
        %v1120 = vsel %vm437, %v1000, 0.0
        %1121 = vadd.xlane.f32.xlu0 %v1120
        %v1122 = vpop.xlane.xlu0 %1121
        %v1123 = vsel %vm437, %v1002, 0.0
        %1124 = vadd.xlane.f32.xlu0 %v1123
        %v1125 = vpop.xlane.xlu0 %1124
        %v1126 = vsel %vm437, %v1004, 0.0
        %1127 = vadd.xlane.f32.xlu0 %v1126
        %v1128 = vpop.xlane.xlu0 %1127
        %v1129 = vsel %vm437, %v1006, 0.0
        %1130 = vadd.xlane.f32.xlu0 %v1129
        %v1131 = vpop.xlane.xlu0 %1130
        %v1132 = vsel %vm437, %v1008, 0.0
        %1133 = vadd.xlane.f32.xlu0 %v1132
        %v1134 = vpop.xlane.xlu0 %1133
        %v1135 = vsel %vm437, %v1010, 0.0
        %1136 = vadd.xlane.f32.xlu0 %v1135
        %v1137 = vpop.xlane.xlu0 %1136
        %v1138 = vsel %vm437, %v1012, 0.0
        %1139 = vadd.xlane.f32.xlu0 %v1138
        %v1140 = vpop.xlane.xlu0 %1139
        %v1141 = vadd.f32 %v1013, %v1047
        %v1142 = vadd.f32 %v1014, %v1050
        %v1143 = vadd.f32 %v1015, %v1053
        %v1144 = vadd.f32 %v1016, %v1056
        %v1145 = vadd.f32 %v1017, %v1059
        %v1146 = vadd.f32 %v1018, %v1062
        %v1147 = vadd.f32 %v1019, %v1065
        %v1148 = vadd.f32 %v1020, %v1068
        %v1149 = vadd.f32 %v1021, %v1071
        %v1150 = vadd.f32 %v1022, %v1074
        %v1151 = vadd.f32 %v1023, %v1077
        %v1152 = vadd.f32 %v1024, %v1080
        %v1153 = vadd.f32 %v1025, %v1083
        %v1154 = vadd.f32 %v1026, %v1086
        %v1155 = vadd.f32 %v1027, %v1089
        %v1156 = vadd.f32 %v1028, %v1092
        %v1157 = vadd.f32 %v1029, %v1095
        %v1158 = vadd.f32 %v1030, %v1098
        %v1159 = vadd.f32 %v1031, %v1101
        %v1160 = vadd.f32 %v1032, %v1104
        %v1161 = vadd.f32 %v1033, %v1107
        %v1162 = vadd.f32 %v1034, %v1110
        %v1163 = vadd.f32 %v1035, %v1113
        %v1164 = vadd.f32 %v1036, %v1116
        %v1165 = vadd.f32 %v1037, %v1119
        %v1166 = vadd.f32 %v1038, %v1122
        %v1167 = vadd.f32 %v1039, %v1125
        %v1168 = vadd.f32 %v1040, %v1128
        %v1169 = vadd.f32 %v1041, %v1131
        %v1170 = vadd.f32 %v1042, %v1134
        %v1171 = vadd.f32 %v1043, %v1137
        %v1172 = vadd.f32 %v1044, %v1140
        %v1173 = vmul.f32 %v950, %v689
        %v1174 = vmul.f32 %v952, %v690
        %v1175 = vmul.f32 %v954, %v691
        %v1176 = vmul.f32 %v956, %v692
        %v1177 = vmul.f32 %v958, %v689
        %v1178 = vmul.f32 %v960, %v690
        %v1179 = vmul.f32 %v962, %v691
        %v1180 = vmul.f32 %v964, %v692
        %v1181 = vmul.f32 %v966, %v689
        %v1182 = vmul.f32 %v968, %v690
        %v1183 = vmul.f32 %v970, %v691
        %v1184 = vmul.f32 %v972, %v692
        %v1185 = vmul.f32 %v974, %v689
        %v1186 = vmul.f32 %v976, %v690
        %v1187 = vmul.f32 %v978, %v691
        %v1188 = vmul.f32 %v980, %v692
        %v1189 = vmul.f32 %v982, %v689
        %v1190 = vmul.f32 %v984, %v690
        %v1191 = vmul.f32 %v986, %v691
        %v1192 = vmul.f32 %v988, %v692
        %v1193 = vmul.f32 %v990, %v689
        %v1194 = vmul.f32 %v992, %v690
        %v1195 = vmul.f32 %v994, %v691
        %v1196 = vmul.f32 %v996, %v692
        %v1197 = vmul.f32 %v998, %v689
        %v1198 = vmul.f32 %v1000, %v690
        %v1199 = vmul.f32 %v1002, %v691
        %v1200 = vmul.f32 %v1004, %v692
        %v1201 = vmul.f32 %v1006, %v689
        %v1202 = vmul.f32 %v1008, %v690
        %v1203 = vmul.f32 %v1010, %v691
        %v1204 = vmul.f32 %v1012, %v692
        %v1205 = vsel %vm437, %v1173, 0.0
        %1206 = vadd.xlane.f32.xlu0 %v1205
        %v1207 = vpop.xlane.xlu0 %1206
        %v1208 = vsel %vm437, %v1174, 0.0
        %1209 = vadd.xlane.f32.xlu0 %v1208
        %v1210 = vpop.xlane.xlu0 %1209
        %v1211 = vsel %vm437, %v1175, 0.0
        %1212 = vadd.xlane.f32.xlu0 %v1211
        %v1213 = vpop.xlane.xlu0 %1212
        %v1214 = vsel %vm437, %v1176, 0.0
        %1215 = vadd.xlane.f32.xlu0 %v1214
        %v1216 = vpop.xlane.xlu0 %1215
        %v1217 = vsel %vm437, %v1177, 0.0
        %1218 = vadd.xlane.f32.xlu0 %v1217
        %v1219 = vpop.xlane.xlu0 %1218
        %v1220 = vsel %vm437, %v1178, 0.0
        %1221 = vadd.xlane.f32.xlu0 %v1220
        %v1222 = vpop.xlane.xlu0 %1221
        %v1223 = vsel %vm437, %v1179, 0.0
        %1224 = vadd.xlane.f32.xlu0 %v1223
        %v1225 = vpop.xlane.xlu0 %1224
        %v1226 = vsel %vm437, %v1180, 0.0
        %1227 = vadd.xlane.f32.xlu0 %v1226
        %v1228 = vpop.xlane.xlu0 %1227
        %v1229 = vsel %vm437, %v1181, 0.0
        %1230 = vadd.xlane.f32.xlu0 %v1229
        %v1231 = vpop.xlane.xlu0 %1230
        %v1232 = vsel %vm437, %v1182, 0.0
        %1233 = vadd.xlane.f32.xlu0 %v1232
        %v1234 = vpop.xlane.xlu0 %1233
        %v1235 = vsel %vm437, %v1183, 0.0
        %1236 = vadd.xlane.f32.xlu0 %v1235
        %v1237 = vpop.xlane.xlu0 %1236
        %v1238 = vsel %vm437, %v1184, 0.0
        %1239 = vadd.xlane.f32.xlu0 %v1238
        %v1240 = vpop.xlane.xlu0 %1239
        %v1241 = vsel %vm437, %v1185, 0.0
        %1242 = vadd.xlane.f32.xlu0 %v1241
        %v1243 = vpop.xlane.xlu0 %1242
        %v1244 = vsel %vm437, %v1186, 0.0
        %1245 = vadd.xlane.f32.xlu0 %v1244
        %v1246 = vpop.xlane.xlu0 %1245
        %v1247 = vsel %vm437, %v1187, 0.0
        %1248 = vadd.xlane.f32.xlu0 %v1247
        %v1249 = vpop.xlane.xlu0 %1248
        %v1250 = vsel %vm437, %v1188, 0.0
        %1251 = vadd.xlane.f32.xlu0 %v1250
        %v1252 = vpop.xlane.xlu0 %1251
        %v1253 = vsel %vm437, %v1189, 0.0
        %1254 = vadd.xlane.f32.xlu0 %v1253
        %v1255 = vpop.xlane.xlu0 %1254
        %v1256 = vsel %vm437, %v1190, 0.0
        %1257 = vadd.xlane.f32.xlu0 %v1256
        %v1258 = vpop.xlane.xlu0 %1257
        %v1259 = vsel %vm437, %v1191, 0.0
        %1260 = vadd.xlane.f32.xlu0 %v1259
        %v1261 = vpop.xlane.xlu0 %1260
        %v1262 = vsel %vm437, %v1192, 0.0
        %1263 = vadd.xlane.f32.xlu0 %v1262
        %v1264 = vpop.xlane.xlu0 %1263
        %v1265 = vsel %vm437, %v1193, 0.0
        %1266 = vadd.xlane.f32.xlu0 %v1265
        %v1267 = vpop.xlane.xlu0 %1266
        %v1268 = vsel %vm437, %v1194, 0.0
        %1269 = vadd.xlane.f32.xlu0 %v1268
        %v1270 = vpop.xlane.xlu0 %1269
        %v1271 = vsel %vm437, %v1195, 0.0
        %1272 = vadd.xlane.f32.xlu0 %v1271
        %v1273 = vpop.xlane.xlu0 %1272
        %v1274 = vsel %vm437, %v1196, 0.0
        %1275 = vadd.xlane.f32.xlu0 %v1274
        %v1276 = vpop.xlane.xlu0 %1275
        %v1277 = vsel %vm437, %v1197, 0.0
        %1278 = vadd.xlane.f32.xlu0 %v1277
        %v1279 = vpop.xlane.xlu0 %1278
        %v1280 = vsel %vm437, %v1198, 0.0
        %1281 = vadd.xlane.f32.xlu0 %v1280
        %v1282 = vpop.xlane.xlu0 %1281
        %v1283 = vsel %vm437, %v1199, 0.0
        %1284 = vadd.xlane.f32.xlu0 %v1283
        %v1285 = vpop.xlane.xlu0 %1284
        %v1286 = vsel %vm437, %v1200, 0.0
        %1287 = vadd.xlane.f32.xlu0 %v1286
        %v1288 = vpop.xlane.xlu0 %1287
        %v1289 = vsel %vm437, %v1201, 0.0
        %1290 = vadd.xlane.f32.xlu0 %v1289
        %v1291 = vpop.xlane.xlu0 %1290
        %v1292 = vsel %vm437, %v1202, 0.0
        %1293 = vadd.xlane.f32.xlu0 %v1292
        %v1294 = vpop.xlane.xlu0 %1293
        %v1295 = vsel %vm437, %v1203, 0.0
        %1296 = vadd.xlane.f32.xlu0 %v1295
        %v1297 = vpop.xlane.xlu0 %1296
        %v1298 = vsel %vm437, %v1204, 0.0
        %1299 = vadd.xlane.f32.xlu0 %v1298
        %v1300 = vpop.xlane.xlu0 %1299
        %v1301 = vadd.f32 %v1013, %v1207
        %v1302 = vadd.f32 %v1014, %v1210
        %v1303 = vadd.f32 %v1015, %v1213
        %v1304 = vadd.f32 %v1016, %v1216
        %v1305 = vadd.f32 %v1017, %v1219
        %v1306 = vadd.f32 %v1018, %v1222
        %v1307 = vadd.f32 %v1019, %v1225
        %v1308 = vadd.f32 %v1020, %v1228
        %v1309 = vadd.f32 %v1021, %v1231
        %v1310 = vadd.f32 %v1022, %v1234
        %v1311 = vadd.f32 %v1023, %v1237
        %v1312 = vadd.f32 %v1024, %v1240
        %v1313 = vadd.f32 %v1025, %v1243
        %v1314 = vadd.f32 %v1026, %v1246
        %v1315 = vadd.f32 %v1027, %v1249
        %v1316 = vadd.f32 %v1028, %v1252
        %v1317 = vadd.f32 %v1029, %v1255
        %v1318 = vadd.f32 %v1030, %v1258
        %v1319 = vadd.f32 %v1031, %v1261
        %v1320 = vadd.f32 %v1032, %v1264
        %v1321 = vadd.f32 %v1033, %v1267
        %v1322 = vadd.f32 %v1034, %v1270
        %v1323 = vadd.f32 %v1035, %v1273
        %v1324 = vadd.f32 %v1036, %v1276
        %v1325 = vadd.f32 %v1037, %v1279
        %v1326 = vadd.f32 %v1038, %v1282
        %v1327 = vadd.f32 %v1039, %v1285
        %v1328 = vadd.f32 %v1040, %v1288
        %v1329 = vadd.f32 %v1041, %v1291
        %v1330 = vadd.f32 %v1042, %v1294
        %v1331 = vadd.f32 %v1043, %v1297
        %v1332 = vadd.f32 %v1044, %v1300
        %v1333 = vrcp.pop %v1141
        %v1334 = vrcp.pop %v1142
        %v1335 = vrcp.pop %v1143
        %v1336 = vrcp.pop %v1144
        %v1337 = vrcp.pop %v1145
        %v1338 = vrcp.pop %v1146
        %v1339 = vrcp.pop %v1147
        %v1340 = vrcp.pop %v1148
        %v1341 = vrcp.pop %v1149
        %v1342 = vrcp.pop %v1150
        %v1343 = vrcp.pop %v1151
        %v1344 = vrcp.pop %v1152
        %v1345 = vrcp.pop %v1153
        %v1346 = vrcp.pop %v1154
        %v1347 = vrcp.pop %v1155
        %v1348 = vrcp.pop %v1156
        %v1349 = vrcp.pop %v1157
        %v1350 = vrcp.pop %v1158
        %v1351 = vrcp.pop %v1159
        %v1352 = vrcp.pop %v1160
        %v1353 = vrcp.pop %v1161
        %v1354 = vrcp.pop %v1162
        %v1355 = vrcp.pop %v1163
        %v1356 = vrcp.pop %v1164
        %v1357 = vrcp.pop %v1165
        %v1358 = vrcp.pop %v1166
        %v1359 = vrcp.pop %v1167
        %v1360 = vrcp.pop %v1168
        %v1361 = vrcp.pop %v1169
        %v1362 = vrcp.pop %v1170
        %v1363 = vrcp.pop %v1171
        %v1364 = vrcp.pop %v1172
        %v1365 = vmul.f32 %v1301, %v1333
        %v1366 = vmul.f32 %v1302, %v1334
        %v1367 = vmul.f32 %v1303, %v1335
        %v1368 = vmul.f32 %v1304, %v1336
        %v1369 = vmul.f32 %v1305, %v1337
        %v1370 = vmul.f32 %v1306, %v1338
        %v1371 = vmul.f32 %v1307, %v1339
        %v1372 = vmul.f32 %v1308, %v1340
        %v1373 = vmul.f32 %v1309, %v1341
        %v1374 = vmul.f32 %v1310, %v1342
        %v1375 = vmul.f32 %v1311, %v1343
        %v1376 = vmul.f32 %v1312, %v1344
        %v1377 = vmul.f32 %v1313, %v1345
        %v1378 = vmul.f32 %v1314, %v1346
        %v1379 = vmul.f32 %v1315, %v1347
        %v1380 = vmul.f32 %v1316, %v1348
        %v1381 = vmul.f32 %v1317, %v1349
        %v1382 = vmul.f32 %v1318, %v1350
        %v1383 = vmul.f32 %v1319, %v1351
        %v1384 = vmul.f32 %v1320, %v1352
        %v1385 = vmul.f32 %v1321, %v1353
        %v1386 = vmul.f32 %v1322, %v1354
        %v1387 = vmul.f32 %v1323, %v1355
        %v1388 = vmul.f32 %v1324, %v1356
        %v1389 = vmul.f32 %v1325, %v1357
        %v1390 = vmul.f32 %v1326, %v1358
        %v1391 = vmul.f32 %v1327, %v1359
        %v1392 = vmul.f32 %v1328, %v1360
        %v1393 = vmul.f32 %v1329, %v1361
        %v1394 = vmul.f32 %v1330, %v1362
        %v1395 = vmul.f32 %v1331, %v1363
        %v1396 = vmul.f32 %v1332, %v1364
        %v1397 = vld [vmem:[%s246] sm:$0xff]
        %v1399 = vlaneseq
        %v1400 = vshrl.u32 %v1399, 7
        %v1401 = vsub.s32 0, %v1400
        %v1402 = vrot.slane %v1397, %v1401
        %1404 = vbcast.lane.b32.xlu0 %v1402, 256
        %v1405 = vpop.permute.xlu0 %1404
        %s1407 = sor.u32 256, 8
        %1408 = vbcast.lane.b32.xlu0 %v1402, %s1407
        %v1409 = vpop.permute.xlu0 %1408
        %s1411 = sor.u32 256, 16
        %1412 = vbcast.lane.b32.xlu0 %v1402, %s1411
        %v1413 = vpop.permute.xlu0 %1412
        %s1415 = sor.u32 256, 24
        %1416 = vbcast.lane.b32.xlu0 %v1402, %s1415
        %v1417 = vpop.permute.xlu0 %1416
        %v1418 = vlaneseq
        %v1419 = vshrl.u32 %v1418, 7
        %v1420 = vsub.s32 1, %v1419
        %v1421 = vrot.slane %v1397, %v1420
        %1423 = vbcast.lane.b32.xlu0 %v1421, 256
        %v1424 = vpop.permute.xlu0 %1423
        %s1426 = sor.u32 256, 8
        %1427 = vbcast.lane.b32.xlu0 %v1421, %s1426
        %v1428 = vpop.permute.xlu0 %1427
        %s1430 = sor.u32 256, 16
        %1431 = vbcast.lane.b32.xlu0 %v1421, %s1430
        %v1432 = vpop.permute.xlu0 %1431
        %s1434 = sor.u32 256, 24
        %1435 = vbcast.lane.b32.xlu0 %v1421, %s1434
        %v1436 = vpop.permute.xlu0 %1435
        %v1437 = vlaneseq
        %v1438 = vshrl.u32 %v1437, 7
        %v1439 = vsub.s32 2, %v1438
        %v1440 = vrot.slane %v1397, %v1439
        %1442 = vbcast.lane.b32.xlu0 %v1440, 256
        %v1443 = vpop.permute.xlu0 %1442
        %s1445 = sor.u32 256, 8
        %1446 = vbcast.lane.b32.xlu0 %v1440, %s1445
        %v1447 = vpop.permute.xlu0 %1446
        %s1449 = sor.u32 256, 16
        %1450 = vbcast.lane.b32.xlu0 %v1440, %s1449
        %v1451 = vpop.permute.xlu0 %1450
        %s1453 = sor.u32 256, 24
        %1454 = vbcast.lane.b32.xlu0 %v1440, %s1453
        %v1455 = vpop.permute.xlu0 %1454
        %v1456 = vlaneseq
        %v1457 = vshrl.u32 %v1456, 7
        %v1458 = vsub.s32 3, %v1457
        %v1459 = vrot.slane %v1397, %v1458
        %1461 = vbcast.lane.b32.xlu0 %v1459, 256
        %v1462 = vpop.permute.xlu0 %1461
        %s1464 = sor.u32 256, 8
        %1465 = vbcast.lane.b32.xlu0 %v1459, %s1464
        %v1466 = vpop.permute.xlu0 %1465
        %s1468 = sor.u32 256, 16
        %1469 = vbcast.lane.b32.xlu0 %v1459, %s1468
        %v1470 = vpop.permute.xlu0 %1469
        %s1472 = sor.u32 256, 24
        %1473 = vbcast.lane.b32.xlu0 %v1459, %s1472
        %v1474 = vpop.permute.xlu0 %1473
        %v1475 = vlaneseq
        %v1476 = vshrl.u32 %v1475, 7
        %v1477 = vsub.s32 4, %v1476
        %v1478 = vrot.slane %v1397, %v1477
        %1480 = vbcast.lane.b32.xlu0 %v1478, 256
        %v1481 = vpop.permute.xlu0 %1480
        %s1483 = sor.u32 256, 8
        %1484 = vbcast.lane.b32.xlu0 %v1478, %s1483
        %v1485 = vpop.permute.xlu0 %1484
        %s1487 = sor.u32 256, 16
        %1488 = vbcast.lane.b32.xlu0 %v1478, %s1487
        %v1489 = vpop.permute.xlu0 %1488
        %s1491 = sor.u32 256, 24
        %1492 = vbcast.lane.b32.xlu0 %v1478, %s1491
        %v1493 = vpop.permute.xlu0 %1492
        %v1494 = vlaneseq
        %v1495 = vshrl.u32 %v1494, 7
        %v1496 = vsub.s32 5, %v1495
        %v1497 = vrot.slane %v1397, %v1496
        %1499 = vbcast.lane.b32.xlu0 %v1497, 256
        %v1500 = vpop.permute.xlu0 %1499
        %s1502 = sor.u32 256, 8
        %1503 = vbcast.lane.b32.xlu0 %v1497, %s1502
        %v1504 = vpop.permute.xlu0 %1503
        %s1506 = sor.u32 256, 16
        %1507 = vbcast.lane.b32.xlu0 %v1497, %s1506
        %v1508 = vpop.permute.xlu0 %1507
        %s1510 = sor.u32 256, 24
        %1511 = vbcast.lane.b32.xlu0 %v1497, %s1510
        %v1512 = vpop.permute.xlu0 %1511
        %v1513 = vlaneseq
        %v1514 = vshrl.u32 %v1513, 7
        %v1515 = vsub.s32 6, %v1514
        %v1516 = vrot.slane %v1397, %v1515
        %1518 = vbcast.lane.b32.xlu0 %v1516, 256
        %v1519 = vpop.permute.xlu0 %1518
        %s1521 = sor.u32 256, 8
        %1522 = vbcast.lane.b32.xlu0 %v1516, %s1521
        %v1523 = vpop.permute.xlu0 %1522
        %s1525 = sor.u32 256, 16
        %1526 = vbcast.lane.b32.xlu0 %v1516, %s1525
        %v1527 = vpop.permute.xlu0 %1526
        %s1529 = sor.u32 256, 24
        %1530 = vbcast.lane.b32.xlu0 %v1516, %s1529
        %v1531 = vpop.permute.xlu0 %1530
        %v1532 = vlaneseq
        %v1533 = vshrl.u32 %v1532, 7
        %v1534 = vsub.s32 7, %v1533
        %v1535 = vrot.slane %v1397, %v1534
        %1537 = vbcast.lane.b32.xlu0 %v1535, 256
        %v1538 = vpop.permute.xlu0 %1537
        %s1540 = sor.u32 256, 8
        %1541 = vbcast.lane.b32.xlu0 %v1535, %s1540
        %v1542 = vpop.permute.xlu0 %1541
        %s1544 = sor.u32 256, 16
        %1545 = vbcast.lane.b32.xlu0 %v1535, %s1544
        %v1546 = vpop.permute.xlu0 %1545
        %s1548 = sor.u32 256, 24
        %1549 = vbcast.lane.b32.xlu0 %v1535, %s1548
        %v1550 = vpop.permute.xlu0 %1549
        %v1583 = vadd.f32 %v1365, %v1405
        %v1584 = vadd.f32 %v1366, %v1409
        %v1585 = vadd.f32 %v1367, %v1413
        %v1586 = vadd.f32 %v1368, %v1417
        %v1587 = vadd.f32 %v1369, %v1424
        %v1588 = vadd.f32 %v1370, %v1428
        %v1589 = vadd.f32 %v1371, %v1432
        %v1590 = vadd.f32 %v1372, %v1436
        %v1591 = vadd.f32 %v1373, %v1443
        %v1592 = vadd.f32 %v1374, %v1447
        %v1593 = vadd.f32 %v1375, %v1451
        %v1594 = vadd.f32 %v1376, %v1455
        %v1595 = vadd.f32 %v1377, %v1462
        %v1596 = vadd.f32 %v1378, %v1466
        %v1597 = vadd.f32 %v1379, %v1470
        %v1598 = vadd.f32 %v1380, %v1474
        %v1599 = vadd.f32 %v1381, %v1481
        %v1600 = vadd.f32 %v1382, %v1485
        %v1601 = vadd.f32 %v1383, %v1489
        %v1602 = vadd.f32 %v1384, %v1493
        %v1603 = vadd.f32 %v1385, %v1500
        %v1604 = vadd.f32 %v1386, %v1504
        %v1605 = vadd.f32 %v1387, %v1508
        %v1606 = vadd.f32 %v1388, %v1512
        %v1607 = vadd.f32 %v1389, %v1519
        %v1608 = vadd.f32 %v1390, %v1523
        %v1609 = vadd.f32 %v1391, %v1527
        %v1610 = vadd.f32 %v1392, %v1531
        %v1611 = vadd.f32 %v1393, %v1538
        %v1612 = vadd.f32 %v1394, %v1542
        %v1613 = vadd.f32 %v1395, %v1546
        %v1614 = vadd.f32 %v1396, %v1550
        %1647 = vset.pattern.permute.xlu0 0
        %1648 = vperm.xlu0 %1647, %v1583
        %v1649 = vpop.permute.xlu0 %1648
        %1650 = vset.pattern.permute.xlu0 0
        %1651 = vperm.xlu0 %1650, %v1584
        %v1652 = vpop.permute.xlu0 %1651
        %1653 = vset.pattern.permute.xlu0 0
        %1654 = vperm.xlu0 %1653, %v1585
        %v1655 = vpop.permute.xlu0 %1654
        %1656 = vset.pattern.permute.xlu0 0
        %1657 = vperm.xlu0 %1656, %v1586
        %v1658 = vpop.permute.xlu0 %1657
        %1659 = vset.pattern.permute.xlu0 0
        %1660 = vperm.xlu0 %1659, %v1587
        %v1661 = vpop.permute.xlu0 %1660
        %1662 = vset.pattern.permute.xlu0 0
        %1663 = vperm.xlu0 %1662, %v1588
        %v1664 = vpop.permute.xlu0 %1663
        %1665 = vset.pattern.permute.xlu0 0
        %1666 = vperm.xlu0 %1665, %v1589
        %v1667 = vpop.permute.xlu0 %1666
        %1668 = vset.pattern.permute.xlu0 0
        %1669 = vperm.xlu0 %1668, %v1590
        %v1670 = vpop.permute.xlu0 %1669
        %1671 = vset.pattern.permute.xlu0 0
        %1672 = vperm.xlu0 %1671, %v1591
        %v1673 = vpop.permute.xlu0 %1672
        %1674 = vset.pattern.permute.xlu0 0
        %1675 = vperm.xlu0 %1674, %v1592
        %v1676 = vpop.permute.xlu0 %1675
        %1677 = vset.pattern.permute.xlu0 0
        %1678 = vperm.xlu0 %1677, %v1593
        %v1679 = vpop.permute.xlu0 %1678
        %1680 = vset.pattern.permute.xlu0 0
        %1681 = vperm.xlu0 %1680, %v1594
        %v1682 = vpop.permute.xlu0 %1681
        %1683 = vset.pattern.permute.xlu0 0
        %1684 = vperm.xlu0 %1683, %v1595
        %v1685 = vpop.permute.xlu0 %1684
        %1686 = vset.pattern.permute.xlu0 0
        %1687 = vperm.xlu0 %1686, %v1596
        %v1688 = vpop.permute.xlu0 %1687
        %1689 = vset.pattern.permute.xlu0 0
        %1690 = vperm.xlu0 %1689, %v1597
        %v1691 = vpop.permute.xlu0 %1690
        %1692 = vset.pattern.permute.xlu0 0
        %1693 = vperm.xlu0 %1692, %v1598
        %v1694 = vpop.permute.xlu0 %1693
        %1695 = vset.pattern.permute.xlu0 0
        %1696 = vperm.xlu0 %1695, %v1599
        %v1697 = vpop.permute.xlu0 %1696
        %1698 = vset.pattern.permute.xlu0 0
        %1699 = vperm.xlu0 %1698, %v1600
        %v1700 = vpop.permute.xlu0 %1699
        %1701 = vset.pattern.permute.xlu0 0
        %1702 = vperm.xlu0 %1701, %v1601
        %v1703 = vpop.permute.xlu0 %1702
        %1704 = vset.pattern.permute.xlu0 0
        %1705 = vperm.xlu0 %1704, %v1602
        %v1706 = vpop.permute.xlu0 %1705
        %1707 = vset.pattern.permute.xlu0 0
        %1708 = vperm.xlu0 %1707, %v1603
        %v1709 = vpop.permute.xlu0 %1708
        %1710 = vset.pattern.permute.xlu0 0
        %1711 = vperm.xlu0 %1710, %v1604
        %v1712 = vpop.permute.xlu0 %1711
        %1713 = vset.pattern.permute.xlu0 0
        %1714 = vperm.xlu0 %1713, %v1605
        %v1715 = vpop.permute.xlu0 %1714
        %1716 = vset.pattern.permute.xlu0 0
        %1717 = vperm.xlu0 %1716, %v1606
        %v1718 = vpop.permute.xlu0 %1717
        %1719 = vset.pattern.permute.xlu0 0
        %1720 = vperm.xlu0 %1719, %v1607
        %v1721 = vpop.permute.xlu0 %1720
        %1722 = vset.pattern.permute.xlu0 0
        %1723 = vperm.xlu0 %1722, %v1608
        %v1724 = vpop.permute.xlu0 %1723
        %1725 = vset.pattern.permute.xlu0 0
        %1726 = vperm.xlu0 %1725, %v1609
        %v1727 = vpop.permute.xlu0 %1726
        %1728 = vset.pattern.permute.xlu0 0
        %1729 = vperm.xlu0 %1728, %v1610
        %v1730 = vpop.permute.xlu0 %1729
        %1731 = vset.pattern.permute.xlu0 0
        %1732 = vperm.xlu0 %1731, %v1611
        %v1733 = vpop.permute.xlu0 %1732
        %1734 = vset.pattern.permute.xlu0 0
        %1735 = vperm.xlu0 %1734, %v1612
        %v1736 = vpop.permute.xlu0 %1735
        %1737 = vset.pattern.permute.xlu0 0
        %1738 = vperm.xlu0 %1737, %v1613
        %v1739 = vpop.permute.xlu0 %1738
        %1740 = vset.pattern.permute.xlu0 0
        %1741 = vperm.xlu0 %1740, %v1614
        %v1742 = vpop.permute.xlu0 %1741
        %v1743 = vlaneseq
        %v1744 = vand.u32 %v1743, 127
        %v1745 = vlaneseq
        %v1746 = vshrl.u32 %v1745, 7
        %v1747 = vsub.s32 %v1744, %v1746
        %v1748 = vrot.slane %v1649, %v1747
        %v1749 = vadd.s32 %v1744, 4294967288
        %v1750 = vlaneseq
        %v1751 = vshrl.u32 %v1750, 7
        %v1752 = vsub.s32 %v1749, %v1751
        %v1753 = vrot.slane %v1652, %v1752
        %vm1754 = vcmask 130112
        %v1755 = vsel %vm1754, %v1753, %v1748
        %v1756 = vadd.s32 %v1744, 4294967280
        %v1757 = vlaneseq
        %v1758 = vshrl.u32 %v1757, 7
        %v1759 = vsub.s32 %v1756, %v1758
        %v1760 = vrot.slane %v1655, %v1759
        %vm1761 = vcmask 195712
        %v1762 = vsel %vm1761, %v1760, %v1755
        %v1763 = vadd.s32 %v1744, 4294967272
        %v1764 = vlaneseq
        %v1765 = vshrl.u32 %v1764, 7
        %v1766 = vsub.s32 %v1763, %v1765
        %v1767 = vrot.slane %v1658, %v1766
        %vm1768 = vcmask 261312
        %v1769 = vsel %vm1768, %v1767, %v1762
        %v1770 = vlaneseq
        %v1771 = vshrl.u32 %v1770, 7
        %v1772 = vsub.s32 %v1744, %v1771
        %v1773 = vrot.slane %v1661, %v1772
        %v1774 = vlaneseq
        %v1775 = vshrl.u32 %v1774, 7
        %v1776 = vsub.s32 %v1749, %v1775
        %v1777 = vrot.slane %v1664, %v1776
        %v1778 = vsel %vm1754, %v1777, %v1773
        %v1779 = vlaneseq
        %v1780 = vshrl.u32 %v1779, 7
        %v1781 = vsub.s32 %v1756, %v1780
        %v1782 = vrot.slane %v1667, %v1781
        %v1783 = vsel %vm1761, %v1782, %v1778
        %v1784 = vlaneseq
        %v1785 = vshrl.u32 %v1784, 7
        %v1786 = vsub.s32 %v1763, %v1785
        %v1787 = vrot.slane %v1670, %v1786
        %v1788 = vsel %vm1768, %v1787, %v1783
        %v1789 = vlaneseq
        %v1790 = vshrl.u32 %v1789, 7
        %v1791 = vsub.s32 %v1744, %v1790
        %v1792 = vrot.slane %v1673, %v1791
        %v1793 = vlaneseq
        %v1794 = vshrl.u32 %v1793, 7
        %v1795 = vsub.s32 %v1749, %v1794
        %v1796 = vrot.slane %v1676, %v1795
        %v1797 = vsel %vm1754, %v1796, %v1792
        %v1798 = vlaneseq
        %v1799 = vshrl.u32 %v1798, 7
        %v1800 = vsub.s32 %v1756, %v1799
        %v1801 = vrot.slane %v1679, %v1800
        %v1802 = vsel %vm1761, %v1801, %v1797
        %v1803 = vlaneseq
        %v1804 = vshrl.u32 %v1803, 7
        %v1805 = vsub.s32 %v1763, %v1804
        %v1806 = vrot.slane %v1682, %v1805
        %v1807 = vsel %vm1768, %v1806, %v1802
        %v1808 = vlaneseq
        %v1809 = vshrl.u32 %v1808, 7
        %v1810 = vsub.s32 %v1744, %v1809
        %v1811 = vrot.slane %v1685, %v1810
        %v1812 = vlaneseq
        %v1813 = vshrl.u32 %v1812, 7
        %v1814 = vsub.s32 %v1749, %v1813
        %v1815 = vrot.slane %v1688, %v1814
        %v1816 = vsel %vm1754, %v1815, %v1811
        %v1817 = vlaneseq
        %v1818 = vshrl.u32 %v1817, 7
        %v1819 = vsub.s32 %v1756, %v1818
        %v1820 = vrot.slane %v1691, %v1819
        %v1821 = vsel %vm1761, %v1820, %v1816
        %v1822 = vlaneseq
        %v1823 = vshrl.u32 %v1822, 7
        %v1824 = vsub.s32 %v1763, %v1823
        %v1825 = vrot.slane %v1694, %v1824
        %v1826 = vsel %vm1768, %v1825, %v1821
        %v1827 = vlaneseq
        %v1828 = vshrl.u32 %v1827, 7
        %v1829 = vsub.s32 %v1744, %v1828
        %v1830 = vrot.slane %v1697, %v1829
        %v1831 = vlaneseq
        %v1832 = vshrl.u32 %v1831, 7
        %v1833 = vsub.s32 %v1749, %v1832
        %v1834 = vrot.slane %v1700, %v1833
        %v1835 = vsel %vm1754, %v1834, %v1830
        %v1836 = vlaneseq
        %v1837 = vshrl.u32 %v1836, 7
        %v1838 = vsub.s32 %v1756, %v1837
        %v1839 = vrot.slane %v1703, %v1838
        %v1840 = vsel %vm1761, %v1839, %v1835
        %v1841 = vlaneseq
        %v1842 = vshrl.u32 %v1841, 7
        %v1843 = vsub.s32 %v1763, %v1842
        %v1844 = vrot.slane %v1706, %v1843
        %v1845 = vsel %vm1768, %v1844, %v1840
        %v1846 = vlaneseq
        %v1847 = vshrl.u32 %v1846, 7
        %v1848 = vsub.s32 %v1744, %v1847
        %v1849 = vrot.slane %v1709, %v1848
        %v1850 = vlaneseq
        %v1851 = vshrl.u32 %v1850, 7
        %v1852 = vsub.s32 %v1749, %v1851
        %v1853 = vrot.slane %v1712, %v1852
        %v1854 = vsel %vm1754, %v1853, %v1849
        %v1855 = vlaneseq
        %v1856 = vshrl.u32 %v1855, 7
        %v1857 = vsub.s32 %v1756, %v1856
        %v1858 = vrot.slane %v1715, %v1857
        %v1859 = vsel %vm1761, %v1858, %v1854
        %v1860 = vlaneseq
        %v1861 = vshrl.u32 %v1860, 7
        %v1862 = vsub.s32 %v1763, %v1861
        %v1863 = vrot.slane %v1718, %v1862
        %v1864 = vsel %vm1768, %v1863, %v1859
        %v1865 = vlaneseq
        %v1866 = vshrl.u32 %v1865, 7
        %v1867 = vsub.s32 %v1744, %v1866
        %v1868 = vrot.slane %v1721, %v1867
        %v1869 = vlaneseq
        %v1870 = vshrl.u32 %v1869, 7
        %v1871 = vsub.s32 %v1749, %v1870
        %v1872 = vrot.slane %v1724, %v1871
        %v1873 = vsel %vm1754, %v1872, %v1868
        %v1874 = vlaneseq
        %v1875 = vshrl.u32 %v1874, 7
        %v1876 = vsub.s32 %v1756, %v1875
        %v1877 = vrot.slane %v1727, %v1876
        %v1878 = vsel %vm1761, %v1877, %v1873
        %v1879 = vlaneseq
        %v1880 = vshrl.u32 %v1879, 7
        %v1881 = vsub.s32 %v1763, %v1880
        %v1882 = vrot.slane %v1730, %v1881
        %v1883 = vsel %vm1768, %v1882, %v1878
        %v1884 = vlaneseq
        %v1885 = vshrl.u32 %v1884, 7
        %v1886 = vsub.s32 %v1744, %v1885
        %v1887 = vrot.slane %v1733, %v1886
        %v1888 = vlaneseq
        %v1889 = vshrl.u32 %v1888, 7
        %v1890 = vsub.s32 %v1749, %v1889
        %v1891 = vrot.slane %v1736, %v1890
        %v1892 = vsel %vm1754, %v1891, %v1887
        %v1893 = vlaneseq
        %v1894 = vshrl.u32 %v1893, 7
        %v1895 = vsub.s32 %v1756, %v1894
        %v1896 = vrot.slane %v1739, %v1895
        %v1897 = vsel %vm1761, %v1896, %v1892
        %v1898 = vlaneseq
        %v1899 = vshrl.u32 %v1898, 7
        %v1900 = vsub.s32 %v1763, %v1899
        %v1901 = vrot.slane %v1742, %v1900
        %v1902 = vsel %vm1768, %v1901, %v1897
        %vm1903 = vcmask 1041409
        %v1904 = vsel %vm1903, %v1788, %v1769
        %vm1905 = vcmask 1042434
        %v1906 = vsel %vm1905, %v1807, %v1904
        %vm1907 = vcmask 1043459
        %v1908 = vsel %vm1907, %v1826, %v1906
        %vm1909 = vcmask 1044484
        %v1910 = vsel %vm1909, %v1845, %v1908
        %vm1911 = vcmask 1045509
        %v1912 = vsel %vm1911, %v1864, %v1910
        %vm1913 = vcmask 1046534
        %v1914 = vsel %vm1913, %v1883, %v1912
        %vm1915 = vcmask 1047559
        %v1916 = vsel %vm1915, %v1902, %v1914
        %1918 = vst.msk [vmem:[%s242] sm:$0xff] %vm307, %v1916
        %s1919 = sand.u32 %s159, 1
        %s1920 = scalar_lea.sflag [#allocation6], %s1919
        %s1921 = sand.u32 %s159, 1
        %s1922 = smul.addr %s1921, 8
        %s1923 = scalar_lea.vmem [#allocation5], %s1922
        // Predicated region
        $region45: #{tpu_custom_call.1} parent=43 // pred_check
          %p1924 = pneg %p169
        $region46: #{tpu_custom_call.1} parent=43 // pred_check_branch
          %1926 = sbr.rel (%p1924) target = $region48
        $region47: #{tpu_custom_call.1} parent=43 // pred_region
          %s1928 = ssub.s32 128, 128
          %1929 = vsyncadd %s1920, %s1928
          %s1930 = smul.addr %s20, 128
          %s1931 = scalar_lea.hbm %s6, %s1930
          %s1933 = sshll.u32 %s1923, 4
          %s1934 = int_to_ptr.vmem [resolvable:$true] %s1933
          %1936 = dma.vmem_to_hbm [thread:$0]  %s1934, 128, %s1931, %s1920
        $region48: #{tpu_custom_call.1} parent=43 // pred_fallthru
          _
      $region44: #{tpu_custom_call.1} parent=5 // pred_fallthru
        _
      %p1937 = scmp.le.s32.totalorder 2, %s15
      // Predicated region
      $region49: #{tpu_custom_call.1} parent=5 // pred_check
        %p1938 = pneg %p1937
      $region50: #{tpu_custom_call.1} parent=5 // pred_check_branch
        %1940 = sbr.rel (%p1938) target = $region52
      $region51: #{tpu_custom_call.1} parent=5 // pred_region
        %s1941 = ssub.s32 %s15, 2
        // Predicated region
        $region53: #{tpu_custom_call.1} parent=51 // pred_check
          %p1942 = pneg %p175
        $region54: #{tpu_custom_call.1} parent=51 // pred_check_branch
          %1944 = sbr.rel (%p1942) target = $region56
        $region55: #{tpu_custom_call.1} parent=51 // pred_region
          %s1945 = sand.u32 %s160, 1
          %s1946 = scalar_lea.sflag [#allocation6], %s1945
          %s1947 = sand.u32 %s160, 1
          %s1948 = smul.addr %s1947, 8
          %s1949 = scalar_lea.vmem [#allocation5], %s1948
          %1950 = dma.done %s1946, 128
        $region56: #{tpu_custom_call.1} parent=51 // pred_fallthru
          _
      $region52: #{tpu_custom_call.1} parent=5 // pred_fallthru
        _
    $region6: #{tpu_custom_call.1} parent=1 // loop_footer
      %s19 = sadd.s32 1, %s15
    $region7: #{tpu_custom_call.1} parent=1 // loop_footer_branch
      %14 = sbr.rel target = $region3
    $region8: #{tpu_custom_call.1} parent=1 // loop_exit
      _
    %1951 = vsyncpa [#allocation6], 1
    %s1952 = scalar_lea.sflag [#allocation6], 1
    %1953 = vsyncpa %s1952, 1

</llo_original>
